<compile_context>
chip_gen: v5e
topology: v5e:2x2
jax: 0.10.0
libtpu: 0.0.40
codegen_flags: <defaults>
</compile_context>

<pallas_src>
import jax
import jax.numpy as jnp
import numpy as np
from jax.experimental import pallas as pl
from jax.experimental.pallas import tpu as pltpu

# ----------------------------- geometry constants ----------------------------
CP = 128                 # padded channel width (lane dim)
FRAME_W = 10             # common flattened-spatial row stride
P1 = 64                  # rows computed for conv1/conv2 (>= 6*10)
P3 = 80                  # rows computed for conv3 (= 8*10)
NVALID12 = 60            # rows of conv1/conv2 result that carry data (6*10)
F1_ROWS = 96             # conv1-out / conv2-in frame rows (max tap read = 85)
F2_ROWS = 112            # conv2-out / conv3-in frame rows (max tap read = 101)


# ----------------------------- Pallas kernel --------------------------------
def fused_conv_kernel(xim_ref, mask_ref, w1_ref, b1_ref, w2_ref, b2_ref,
                      w3_ref, b3_ref, o_ref, f1_ref, f2_ref):
    """Three fused 3x3 convs; intermediates stay in bf16 VMEM scratch frames."""
    # Zero only the frame rows the interior stores below do NOT cover.
    f1_ref[pl.ds(0, 16), :] = jnp.zeros((16, CP), f1_ref.dtype)
    f1_ref[pl.ds(64, F1_ROWS - 64), :] = jnp.zeros((F1_ROWS - 64, CP), f1_ref.dtype)
    f2_ref[pl.ds(0, 32), :] = jnp.zeros((32, CP), f2_ref.dtype)
    f2_ref[pl.ds(80, F2_ROWS - 80), :] = jnp.zeros((F2_ROWS - 80, CP), f2_ref.dtype)

    mask = mask_ref[...]                  # (60,128) bf16 {0,1}: stride-10 col < 6

    def conv_taps(src_ref, w_ref, b_ref, p):
        # 9 accumulated per-tap dots straight off the bf16 stride-10 frame
        # (no im2col buffer, no per-tap casts); f32 accumulation, bias once.
        acc = jnp.dot(src_ref[pl.ds(0, p), :], w_ref[0],
                      preferred_element_type=jnp.float32)
        for t in range(1, 9):
            off = (t // 3) * FRAME_W + (t % 3)
            acc = acc + jnp.dot(src_ref[pl.ds(off, p), :], w_ref[t],
                                preferred_element_type=jnp.float32)
        return acc + b_ref[...]

    # conv1 (1->30, pad 0): single dot on the pre-packed 9-tap im2col block.
    y1 = jnp.dot(xim_ref[...], w1_ref[...],
                 preferred_element_type=jnp.float32) + b1_ref[...]
    f1_ref[pl.ds(FRAME_W + 1, NVALID12), :] = (
        (y1[0:NVALID12, :] * mask).astype(f1_ref.dtype))

    # conv2 (30->64, pad 1): masked 6x6x64 -> interior of frame2 (offset (2,2)).
    y2 = conv_taps(f1_ref, w2_ref, b2_ref, P1)
    f2_ref[pl.ds(2 * FRAME_W + 2, NVALID12), :] = (
        (y2[0:NVALID12, :] * mask).astype(f2_ref.dtype))

    # conv3 (64->96, pad 2): 8x8x96, lane-dense store; wrapper strips junk.
    o_ref[...] = conv_taps(f2_ref, w3_ref, b3_ref, P3).astype(o_ref.dtype)


# ----------------------------- one-time packing (outside jit) ----------------
def pack_params(params):
    """Pack weights/biases/mask ONCE; the jitted forward gets ready-made blocks."""
    (w1, b1), (w2, b2), (w3, b3) = params

    def pack_bias(b):
        return jnp.pad(b, (0, CP - b.shape[0])).reshape(1, CP).astype(jnp.float32)

    def pack_taps(w):  # (C_out, C_in, 3, 3) -> (9, 128, 128) bf16, tap-major
        c_out, c_in = w.shape[0], w.shape[1]
        wt = jnp.transpose(w, (2, 3, 1, 0)).reshape(9, c_in, c_out)
        return jnp.pad(wt, ((0, 0), (0, CP - c_in), (0, CP - c_out))
                       ).astype(jnp.bfloat16)

    # conv1 (c_in == 1): all 9 taps fit one 128-deep contraction -> (128,128).
    c1_out = w1.shape[0]
    w1p = jnp.pad(w1.reshape(c1_out, 9).T,                       # (9, 30)
                  ((0, CP - 9), (0, CP - c1_out))).astype(jnp.bfloat16)

    m = (np.arange(NVALID12) % FRAME_W < 6).astype(np.float32)   # valid grid cols
    maskp = jnp.asarray(np.repeat(m[:, None], CP, axis=1), dtype=jnp.bfloat16)

    return (maskp, w1p, pack_bias(b1), pack_taps(w2), pack_bias(b2),
            pack_taps(w3), pack_bias(b3))


def _pack_input_im2col(x_nchw):
    """(1,1,8,8) -> (P1,128) bf16 conv1 im2col on the stride-10 output grid."""
    x = x_nchw[0, 0].astype(jnp.float32)                          # (8, 8)
    taps = [x[dy:dy + 6, dx:dx + 6] for dy in range(3) for dx in range(3)]
    im = jnp.stack(taps, axis=-1)                                 # (6, 6, 9)
    im = jnp.pad(im, ((0, 0), (0, FRAME_W - 6), (0, CP - 9)))     # (6, 10, 128)
    im = im.reshape(NVALID12, CP)
    return jnp.pad(im, ((0, P1 - NVALID12), (0, 0))).astype(jnp.bfloat16)


def fused_features_pallas(x_nchw, packed):
    """Conv2d(1,30,3,1,0) -> Conv2d(30,64,3,1,1) -> Conv2d(64,96,3,1,2), fused."""
    maskp, w1p, b1p, w2p, b2p, w3p, b3p = packed
    xim = _pack_input_im2col(x_nchw)
    vmem = pl.BlockSpec(memory_space=pltpu.MemorySpace.VMEM)
    out = pl.pallas_call(
        fused_conv_kernel,
        out_shape=jax.ShapeDtypeStruct((P3, CP), jnp.float32),
        in_specs=[vmem] * 8,
        out_specs=vmem,
        scratch_shapes=[
            pltpu.VMEM((F1_ROWS, CP), jnp.bfloat16),   # conv1-out / conv2-in frame
            pltpu.VMEM((F2_ROWS, CP), jnp.bfloat16),   # conv2-out / conv3-in frame
        ],
    )(xim, maskp, w1p, b1p, w2p, b2p, w3p, b3p)
    v1 = out.reshape(8, FRAME_W, CP)[:, :8, :96]       # (H, W, C) valid block
    return jnp.transpose(v1, (2, 0, 1))[None]          # (1, 96, 8, 8)


@jax.jit
def model_forward(x_nchw, packed):
    v1 = fused_features_pallas(x_nchw, packed)         # (1, 96, 8, 8)
    # TODO(synk): torch.split(v1, [1,1,1], dim=1) on a 96-channel tensor raises in
    # PyTorch (sizes must sum to 96); we keep the prior interpretation: take the
    # first three single-channel slices, so cat(splits) == v1[:, :3].
    splits = (v1[:, 0:1], v1[:, 1:2], v1[:, 2:3])
    return jnp.concatenate(splits, axis=1), splits


# ----------------------------- params & reference ----------------------------
def init_params(key):
    """Deterministic Conv2d params (PyTorch-style uniform bounds)."""
    specs = [(1, 30), (30, 64), (64, 96)]  # (C_in, C_out), all 3x3
    params = []
    for c_in, c_out in specs:
        key, kw, kb = jax.random.split(key, 3)
        bound = 1.0 / np.sqrt(c_in * 3 * 3)
        w = jax.random.uniform(kw, (c_out, c_in, 3, 3), jnp.float32, -bound, bound)
        b = jax.random.uniform(kb, (c_out,), jnp.float32, -bound, bound)
        params.append((w, b))
    return params


def features_ref(x_nchw, params):
    x = x_nchw
    for (w, b), pad in zip(params, (0, 1, 2)):
        x = jax.lax.conv_general_dilated(
            x, w, window_strides=(1, 1), padding=[(pad, pad), (pad, pad)],
            dimension_numbers=("NCHW", "OIHW", "NCHW"),
        ) + b[None, :, None, None]
    return x


if __name__ == "__main__":
    x1 = jax.random.normal(jax.random.PRNGKey(0), (1, 1, 8, 8), dtype=jnp.float32)
    params = init_params(jax.random.PRNGKey(42))
    packed = pack_params(params)          # one-time packing, outside the jit path

    concatenated, splits = model_forward(x1, packed)
    jax.block_until_ready(concatenated)
    for s in splits:
        jax.block_until_ready(s)

    assert concatenated.shape == (1, 3, 8, 8)
    assert all(s.shape == (1, 1, 8, 8) for s in splits)

    # sanity: fused Pallas conv chain vs XLA f32 reference (bf16 matmul operands)
    v1_pallas = fused_features_pallas(x1, packed)
    v1_ref = features_ref(x1, params)
    np.testing.assert_allclose(np.asarray(v1_pallas), np.asarray(v1_ref),
                               rtol=2e-2, atol=2e-2)
    np.testing.assert_allclose(np.asarray(concatenated),
                               np.asarray(v1_ref[:, :3]), rtol=2e-2, atol=2e-2)

    print("KERNEL_OK")
</pallas_src>

<mosaic_0001>
module attributes {stable_mosaic.version = 11 : i64} {
  func.func @fused_conv_kernel(%arg0: memref<64x128xbf16, #tpu.memory_space<vmem>>, %arg1: memref<60x128xbf16, #tpu.memory_space<vmem>>, %arg2: memref<128x128xbf16, #tpu.memory_space<vmem>>, %arg3: memref<1x128xf32, #tpu.memory_space<vmem>>, %arg4: memref<9x128x128xbf16, #tpu.memory_space<vmem>>, %arg5: memref<1x128xf32, #tpu.memory_space<vmem>>, %arg6: memref<9x128x128xbf16, #tpu.memory_space<vmem>>, %arg7: memref<1x128xf32, #tpu.memory_space<vmem>>, %arg8: memref<80x128xf32, #tpu.memory_space<vmem>>, %arg9: memref<96x128xbf16, #tpu.memory_space<vmem>>, %arg10: memref<112x128xbf16, #tpu.memory_space<vmem>>) attributes {dimension_semantics = [], scalar_prefetch = 0 : i64, scratch_operands = 2 : i64, tpu.core_type = #tpu.core_type<tc>} {
    %cst = arith.constant 0.000000e+00 : bf16
    %0 = vector.broadcast %cst : bf16 to vector<16x128xbf16>
    %c0 = arith.constant 0 : index
    %c0_0 = arith.constant 0 : index
    %1 = vector.load %arg9[%c0, %c0_0] : memref<96x128xbf16, #tpu.memory_space<vmem>>, vector<16x128xbf16>
    tpu.vector_store %arg9[%c0, %c0_0], %0 {strides = array<i32>} : memref<96x128xbf16, #tpu.memory_space<vmem>>, vector<16x128xbf16>,
    %cst_1 = arith.constant 0.000000e+00 : bf16
    %2 = vector.broadcast %cst_1 : bf16 to vector<32x128xbf16>
    %c64 = arith.constant 64 : index
    %c0_2 = arith.constant 0 : index
    %3 = vector.load %arg9[%c64, %c0_2] : memref<96x128xbf16, #tpu.memory_space<vmem>>, vector<32x128xbf16>
    tpu.vector_store %arg9[%c64, %c0_2], %2 {strides = array<i32>} : memref<96x128xbf16, #tpu.memory_space<vmem>>, vector<32x128xbf16>,
    %cst_3 = arith.constant 0.000000e+00 : bf16
    %4 = vector.broadcast %cst_3 : bf16 to vector<32x128xbf16>
    %c0_4 = arith.constant 0 : index
    %c0_5 = arith.constant 0 : index
    %5 = vector.load %arg10[%c0_4, %c0_5] : memref<112x128xbf16, #tpu.memory_space<vmem>>, vector<32x128xbf16>
    tpu.vector_store %arg10[%c0_4, %c0_5], %4 {strides = array<i32>} : memref<112x128xbf16, #tpu.memory_space<vmem>>, vector<32x128xbf16>,
    %cst_6 = arith.constant 0.000000e+00 : bf16
    %6 = vector.broadcast %cst_6 : bf16 to vector<32x128xbf16>
    %c80 = arith.constant 80 : index
    %c0_7 = arith.constant 0 : index
    %7 = vector.load %arg10[%c80, %c0_7] : memref<112x128xbf16, #tpu.memory_space<vmem>>, vector<32x128xbf16>
    tpu.vector_store %arg10[%c80, %c0_7], %6 {strides = array<i32>} : memref<112x128xbf16, #tpu.memory_space<vmem>>, vector<32x128xbf16>,
    %c0_8 = arith.constant 0 : index
    %c0_9 = arith.constant 0 : index
    %8 = vector.load %arg1[%c0_8, %c0_9] : memref<60x128xbf16, #tpu.memory_space<vmem>>, vector<60x128xbf16>
    %c0_10 = arith.constant 0 : index
    %c0_11 = arith.constant 0 : index
    %9 = vector.load %arg0[%c0_10, %c0_11] : memref<64x128xbf16, #tpu.memory_space<vmem>>, vector<64x128xbf16>
    %c0_12 = arith.constant 0 : index
    %c0_13 = arith.constant 0 : index
    %10 = vector.load %arg2[%c0_12, %c0_13] : memref<128x128xbf16, #tpu.memory_space<vmem>>, vector<128x128xbf16>
    %cst_14 = arith.constant dense<0.000000e+00> : vector<64x128xf32>
    %11 = tpu.matmul %9, %10, %cst_14 {dimension_numbers = #tpu.dot_dimension_numbers<[1], [0], [0], [1], [0, 0, 1, 1], [], []>} : vector<64x128xbf16>, vector<128x128xbf16>, vector<64x128xf32> -> vector<64x128xf32>
    %c0_15 = arith.constant 0 : index
    %c0_16 = arith.constant 0 : index
    %12 = vector.load %arg3[%c0_15, %c0_16] : memref<1x128xf32, #tpu.memory_space<vmem>>, vector<1x128xf32>
    %13 = vector.broadcast %12 : vector<1x128xf32> to vector<64x128xf32>
    %14 = arith.addf %11, %13 : vector<64x128xf32>
    %15 = vector.extract_strided_slice %14 {offsets = [0, 0], sizes = [60, 128], strides = [1, 1]} : vector<64x128xf32> to vector<60x128xf32>
    %16 = arith.extf %8 : vector<60x128xbf16> to vector<60x128xf32>
    %17 = arith.mulf %15, %16 : vector<60x128xf32>
    %18 = arith.truncf %17 : vector<60x128xf32> to vector<60x128xbf16>
    %c11 = arith.constant 11 : index
    %c0_17 = arith.constant 0 : index
    %19 = vector.load %arg9[%c11, %c0_17] : memref<96x128xbf16, #tpu.memory_space<vmem>>, vector<60x128xbf16>
    tpu.vector_store %arg9[%c11, %c0_17], %18 {strides = array<i32>} : memref<96x128xbf16, #tpu.memory_space<vmem>>, vector<60x128xbf16>,
    %c0_18 = arith.constant 0 : index
    %c0_19 = arith.constant 0 : index
    %20 = vector.load %arg9[%c0_18, %c0_19] : memref<96x128xbf16, #tpu.memory_space<vmem>>, vector<64x128xbf16>
    %c0_20 = arith.constant 0 : index
    %c0_21 = arith.constant 0 : index
    %c0_22 = arith.constant 0 : index
    %21 = vector.load %arg4[%c0_20, %c0_21, %c0_22] : memref<9x128x128xbf16, #tpu.memory_space<vmem>>, vector<1x128x128xbf16>
    %22 = vector.shape_cast %21 : vector<1x128x128xbf16> to vector<128x128xbf16>
    %cst_23 = arith.constant dense<0.000000e+00> : vector<64x128xf32>
    %23 = tpu.matmul %20, %22, %cst_23 {dimension_numbers = #tpu.dot_dimension_numbers<[1], [0], [0], [1], [0, 0, 1, 1], [], []>} : vector<64x128xbf16>, vector<128x128xbf16>, vector<64x128xf32> -> vector<64x128xf32>
    %c1 = arith.constant 1 : index
    %c0_24 = arith.constant 0 : index
    %24 = vector.load %arg9[%c1, %c0_24] : memref<96x128xbf16, #tpu.memory_space<vmem>>, vector<64x128xbf16>
    %c1_25 = arith.constant 1 : index
    %c0_26 = arith.constant 0 : index
    %c0_27 = arith.constant 0 : index
    %25 = vector.load %arg4[%c1_25, %c0_26, %c0_27] : memref<9x128x128xbf16, #tpu.memory_space<vmem>>, vector<1x128x128xbf16>
    %26 = vector.shape_cast %25 : vector<1x128x128xbf16> to vector<128x128xbf16>
    %cst_28 = arith.constant dense<0.000000e+00> : vector<64x128xf32>
    %27 = tpu.matmul %24, %26, %cst_28 {dimension_numbers = #tpu.dot_dimension_numbers<[1], [0], [0], [1], [0, 0, 1, 1], [], []>} : vector<64x128xbf16>, vector<128x128xbf16>, vector<64x128xf32> -> vector<64x128xf32>
    %28 = arith.addf %23, %27 : vector<64x128xf32>
    %c2 = arith.constant 2 : index
    %c0_29 = arith.constant 0 : index
    %29 = vector.load %arg9[%c2, %c0_29] : memref<96x128xbf16, #tpu.memory_space<vmem>>, vector<64x128xbf16>
    %c2_30 = arith.constant 2 : index
    %c0_31 = arith.constant 0 : index
    %c0_32 = arith.constant 0 : index
    %30 = vector.load %arg4[%c2_30, %c0_31, %c0_32] : memref<9x128x128xbf16, #tpu.memory_space<vmem>>, vector<1x128x128xbf16>
    %31 = vector.shape_cast %30 : vector<1x128x128xbf16> to vector<128x128xbf16>
    %cst_33 = arith.constant dense<0.000000e+00> : vector<64x128xf32>
    %32 = tpu.matmul %29, %31, %cst_33 {dimension_numbers = #tpu.dot_dimension_numbers<[1], [0], [0], [1], [0, 0, 1, 1], [], []>} : vector<64x128xbf16>, vector<128x128xbf16>, vector<64x128xf32> -> vector<64x128xf32>
    %33 = arith.addf %28, %32 : vector<64x128xf32>
    %c10 = arith.constant 10 : index
    %c0_34 = arith.constant 0 : index
    %34 = vector.load %arg9[%c10, %c0_34] : memref<96x128xbf16, #tpu.memory_space<vmem>>, vector<64x128xbf16>
    %c3 = arith.constant 3 : index
    %c0_35 = arith.constant 0 : index
    %c0_36 = arith.constant 0 : index
    %35 = vector.load %arg4[%c3, %c0_35, %c0_36] : memref<9x128x128xbf16, #tpu.memory_space<vmem>>, vector<1x128x128xbf16>
    %36 = vector.shape_cast %35 : vector<1x128x128xbf16> to vector<128x128xbf16>
    %cst_37 = arith.constant dense<0.000000e+00> : vector<64x128xf32>
    %37 = tpu.matmul %34, %36, %cst_37 {dimension_numbers = #tpu.dot_dimension_numbers<[1], [0], [0], [1], [0, 0, 1, 1], [], []>} : vector<64x128xbf16>, vector<128x128xbf16>, vector<64x128xf32> -> vector<64x128xf32>
    %38 = arith.addf %33, %37 : vector<64x128xf32>
    %c11_38 = arith.constant 11 : index
    %c0_39 = arith.constant 0 : index
    %39 = vector.load %arg9[%c11_38, %c0_39] : memref<96x128xbf16, #tpu.memory_space<vmem>>, vector<64x128xbf16>
    %c4 = arith.constant 4 : index
    %c0_40 = arith.constant 0 : index
    %c0_41 = arith.constant 0 : index
    %40 = vector.load %arg4[%c4, %c0_40, %c0_41] : memref<9x128x128xbf16, #tpu.memory_space<vmem>>, vector<1x128x128xbf16>
    %41 = vector.shape_cast %40 : vector<1x128x128xbf16> to vector<128x128xbf16>
    %cst_42 = arith.constant dense<0.000000e+00> : vector<64x128xf32>
    %42 = tpu.matmul %39, %41, %cst_42 {dimension_numbers = #tpu.dot_dimension_numbers<[1], [0], [0], [1], [0, 0, 1, 1], [], []>} : vector<64x128xbf16>, vector<128x128xbf16>, vector<64x128xf32> -> vector<64x128xf32>
    %43 = arith.addf %38, %42 : vector<64x128xf32>
    %c12 = arith.constant 12 : index
    %c0_43 = arith.constant 0 : index
    %44 = vector.load %arg9[%c12, %c0_43] : memref<96x128xbf16, #tpu.memory_space<vmem>>, vector<64x128xbf16>
    %c5 = arith.constant 5 : index
    %c0_44 = arith.constant 0 : index
    %c0_45 = arith.constant 0 : index
    %45 = vector.load %arg4[%c5, %c0_44, %c0_45] : memref<9x128x128xbf16, #tpu.memory_space<vmem>>, vector<1x128x128xbf16>
    %46 = vector.shape_cast %45 : vector<1x128x128xbf16> to vector<128x128xbf16>
    %cst_46 = arith.constant dense<0.000000e+00> : vector<64x128xf32>
    %47 = tpu.matmul %44, %46, %cst_46 {dimension_numbers = #tpu.dot_dimension_numbers<[1], [0], [0], [1], [0, 0, 1, 1], [], []>} : vector<64x128xbf16>, vector<128x128xbf16>, vector<64x128xf32> -> vector<64x128xf32>
    %48 = arith.addf %43, %47 : vector<64x128xf32>
    %c20 = arith.constant 20 : index
    %c0_47 = arith.constant 0 : index
    %49 = vector.load %arg9[%c20, %c0_47] : memref<96x128xbf16, #tpu.memory_space<vmem>>, vector<64x128xbf16>
    %c6 = arith.constant 6 : index
    %c0_48 = arith.constant 0 : index
    %c0_49 = arith.constant 0 : index
    %50 = vector.load %arg4[%c6, %c0_48, %c0_49] : memref<9x128x128xbf16, #tpu.memory_space<vmem>>, vector<1x128x128xbf16>
    %51 = vector.shape_cast %50 : vector<1x128x128xbf16> to vector<128x128xbf16>
    %cst_50 = arith.constant dense<0.000000e+00> : vector<64x128xf32>
    %52 = tpu.matmul %49, %51, %cst_50 {dimension_numbers = #tpu.dot_dimension_numbers<[1], [0], [0], [1], [0, 0, 1, 1], [], []>} : vector<64x128xbf16>, vector<128x128xbf16>, vector<64x128xf32> -> vector<64x128xf32>
    %53 = arith.addf %48, %52 : vector<64x128xf32>
    %c21 = arith.constant 21 : index
    %c0_51 = arith.constant 0 : index
    %54 = vector.load %arg9[%c21, %c0_51] : memref<96x128xbf16, #tpu.memory_space<vmem>>, vector<64x128xbf16>
    %c7 = arith.constant 7 : index
    %c0_52 = arith.constant 0 : index
    %c0_53 = arith.constant 0 : index
    %55 = vector.load %arg4[%c7, %c0_52, %c0_53] : memref<9x128x128xbf16, #tpu.memory_space<vmem>>, vector<1x128x128xbf16>
    %56 = vector.shape_cast %55 : vector<1x128x128xbf16> to vector<128x128xbf16>
    %cst_54 = arith.constant dense<0.000000e+00> : vector<64x128xf32>
    %57 = tpu.matmul %54, %56, %cst_54 {dimension_numbers = #tpu.dot_dimension_numbers<[1], [0], [0], [1], [0, 0, 1, 1], [], []>} : vector<64x128xbf16>, vector<128x128xbf16>, vector<64x128xf32> -> vector<64x128xf32>
    %58 = arith.addf %53, %57 : vector<64x128xf32>
    %c22 = arith.constant 22 : index
    %c0_55 = arith.constant 0 : index
    %59 = vector.load %arg9[%c22, %c0_55] : memref<96x128xbf16, #tpu.memory_space<vmem>>, vector<64x128xbf16>
    %c8 = arith.constant 8 : index
    %c0_56 = arith.constant 0 : index
    %c0_57 = arith.constant 0 : index
    %60 = vector.load %arg4[%c8, %c0_56, %c0_57] : memref<9x128x128xbf16, #tpu.memory_space<vmem>>, vector<1x128x128xbf16>
    %61 = vector.shape_cast %60 : vector<1x128x128xbf16> to vector<128x128xbf16>
    %cst_58 = arith.constant dense<0.000000e+00> : vector<64x128xf32>
    %62 = tpu.matmul %59, %61, %cst_58 {dimension_numbers = #tpu.dot_dimension_numbers<[1], [0], [0], [1], [0, 0, 1, 1], [], []>} : vector<64x128xbf16>, vector<128x128xbf16>, vector<64x128xf32> -> vector<64x128xf32>
    %63 = arith.addf %58, %62 : vector<64x128xf32>
    %c0_59 = arith.constant 0 : index
    %c0_60 = arith.constant 0 : index
    %64 = vector.load %arg5[%c0_59, %c0_60] : memref<1x128xf32, #tpu.memory_space<vmem>>, vector<1x128xf32>
    %65 = vector.broadcast %64 : vector<1x128xf32> to vector<64x128xf32>
    %66 = arith.addf %63, %65 : vector<64x128xf32>
    %67 = vector.extract_strided_slice %66 {offsets = [0, 0], sizes = [60, 128], strides = [1, 1]} : vector<64x128xf32> to vector<60x128xf32>
    %68 = arith.extf %8 : vector<60x128xbf16> to vector<60x128xf32>
    %69 = arith.mulf %67, %68 : vector<60x128xf32>
    %70 = arith.truncf %69 : vector<60x128xf32> to vector<60x128xbf16>
    %c22_61 = arith.constant 22 : index
    %c0_62 = arith.constant 0 : index
    %71 = vector.load %arg10[%c22_61, %c0_62] : memref<112x128xbf16, #tpu.memory_space<vmem>>, vector<60x128xbf16>
    tpu.vector_store %arg10[%c22_61, %c0_62], %70 {strides = array<i32>} : memref<112x128xbf16, #tpu.memory_space<vmem>>, vector<60x128xbf16>,
    %c0_63 = arith.constant 0 : index
    %c0_64 = arith.constant 0 : index
    %72 = vector.load %arg10[%c0_63, %c0_64] : memref<112x128xbf16, #tpu.memory_space<vmem>>, vector<80x128xbf16>
    %c0_65 = arith.constant 0 : index
    %c0_66 = arith.constant 0 : index
    %c0_67 = arith.constant 0 : index
    %73 = vector.load %arg6[%c0_65, %c0_66, %c0_67] : memref<9x128x128xbf16, #tpu.memory_space<vmem>>, vector<1x128x128xbf16>
    %74 = vector.shape_cast %73 : vector<1x128x128xbf16> to vector<128x128xbf16>
    %cst_68 = arith.constant dense<0.000000e+00> : vector<80x128xf32>
    %75 = tpu.matmul %72, %74, %cst_68 {dimension_numbers = #tpu.dot_dimension_numbers<[1], [0], [0], [1], [0, 0, 1, 1], [], []>} : vector<80x128xbf16>, vector<128x128xbf16>, vector<80x128xf32> -> vector<80x128xf32>
    %c1_69 = arith.constant 1 : index
    %c0_70 = arith.constant 0 : index
    %76 = vector.load %arg10[%c1_69, %c0_70] : memref<112x128xbf16, #tpu.memory_space<vmem>>, vector<80x128xbf16>
    %c1_71 = arith.constant 1 : index
    %c0_72 = arith.constant 0 : index
    %c0_73 = arith.constant 0 : index
    %77 = vector.load %arg6[%c1_71, %c0_72, %c0_73] : memref<9x128x128xbf16, #tpu.memory_space<vmem>>, vector<1x128x128xbf16>
    %78 = vector.shape_cast %77 : vector<1x128x128xbf16> to vector<128x128xbf16>
    %cst_74 = arith.constant dense<0.000000e+00> : vector<80x128xf32>
    %79 = tpu.matmul %76, %78, %cst_74 {dimension_numbers = #tpu.dot_dimension_numbers<[1], [0], [0], [1], [0, 0, 1, 1], [], []>} : vector<80x128xbf16>, vector<128x128xbf16>, vector<80x128xf32> -> vector<80x128xf32>
    %80 = arith.addf %75, %79 : vector<80x128xf32>
    %c2_75 = arith.constant 2 : index
    %c0_76 = arith.constant 0 : index
    %81 = vector.load %arg10[%c2_75, %c0_76] : memref<112x128xbf16, #tpu.memory_space<vmem>>, vector<80x128xbf16>
    %c2_77 = arith.constant 2 : index
    %c0_78 = arith.constant 0 : index
    %c0_79 = arith.constant 0 : index
    %82 = vector.load %arg6[%c2_77, %c0_78, %c0_79] : memref<9x128x128xbf16, #tpu.memory_space<vmem>>, vector<1x128x128xbf16>
    %83 = vector.shape_cast %82 : vector<1x128x128xbf16> to vector<128x128xbf16>
    %cst_80 = arith.constant dense<0.000000e+00> : vector<80x128xf32>
    %84 = tpu.matmul %81, %83, %cst_80 {dimension_numbers = #tpu.dot_dimension_numbers<[1], [0], [0], [1], [0, 0, 1, 1], [], []>} : vector<80x128xbf16>, vector<128x128xbf16>, vector<80x128xf32> -> vector<80x128xf32>
    %85 = arith.addf %80, %84 : vector<80x128xf32>
    %c10_81 = arith.constant 10 : index
    %c0_82 = arith.constant 0 : index
    %86 = vector.load %arg10[%c10_81, %c0_82] : memref<112x128xbf16, #tpu.memory_space<vmem>>, vector<80x128xbf16>
    %c3_83 = arith.constant 3 : index
    %c0_84 = arith.constant 0 : index
    %c0_85 = arith.constant 0 : index
    %87 = vector.load %arg6[%c3_83, %c0_84, %c0_85] : memref<9x128x128xbf16, #tpu.memory_space<vmem>>, vector<1x128x128xbf16>
    %88 = vector.shape_cast %87 : vector<1x128x128xbf16> to vector<128x128xbf16>
    %cst_86 = arith.constant dense<0.000000e+00> : vector<80x128xf32>
    %89 = tpu.matmul %86, %88, %cst_86 {dimension_numbers = #tpu.dot_dimension_numbers<[1], [0], [0], [1], [0, 0, 1, 1], [], []>} : vector<80x128xbf16>, vector<128x128xbf16>, vector<80x128xf32> -> vector<80x128xf32>
    %90 = arith.addf %85, %89 : vector<80x128xf32>
    %c11_87 = arith.constant 11 : index
    %c0_88 = arith.constant 0 : index
    %91 = vector.load %arg10[%c11_87, %c0_88] : memref<112x128xbf16, #tpu.memory_space<vmem>>, vector<80x128xbf16>
    %c4_89 = arith.constant 4 : index
    %c0_90 = arith.constant 0 : index
    %c0_91 = arith.constant 0 : index
    %92 = vector.load %arg6[%c4_89, %c0_90, %c0_91] : memref<9x128x128xbf16, #tpu.memory_space<vmem>>, vector<1x128x128xbf16>
    %93 = vector.shape_cast %92 : vector<1x128x128xbf16> to vector<128x128xbf16>
    %cst_92 = arith.constant dense<0.000000e+00> : vector<80x128xf32>
    %94 = tpu.matmul %91, %93, %cst_92 {dimension_numbers = #tpu.dot_dimension_numbers<[1], [0], [0], [1], [0, 0, 1, 1], [], []>} : vector<80x128xbf16>, vector<128x128xbf16>, vector<80x128xf32> -> vector<80x128xf32>
    %95 = arith.addf %90, %94 : vector<80x128xf32>
    %c12_93 = arith.constant 12 : index
    %c0_94 = arith.constant 0 : index
    %96 = vector.load %arg10[%c12_93, %c0_94] : memref<112x128xbf16, #tpu.memory_space<vmem>>, vector<80x128xbf16>
    %c5_95 = arith.constant 5 : index
    %c0_96 = arith.constant 0 : index
    %c0_97 = arith.constant 0 : index
    %97 = vector.load %arg6[%c5_95, %c0_96, %c0_97] : memref<9x128x128xbf16, #tpu.memory_space<vmem>>, vector<1x128x128xbf16>
    %98 = vector.shape_cast %97 : vector<1x128x128xbf16> to vector<128x128xbf16>
    %cst_98 = arith.constant dense<0.000000e+00> : vector<80x128xf32>
    %99 = tpu.matmul %96, %98, %cst_98 {dimension_numbers = #tpu.dot_dimension_numbers<[1], [0], [0], [1], [0, 0, 1, 1], [], []>} : vector<80x128xbf16>, vector<128x128xbf16>, vector<80x128xf32> -> vector<80x128xf32>
    %100 = arith.addf %95, %99 : vector<80x128xf32>
    %c20_99 = arith.constant 20 : index
    %c0_100 = arith.constant 0 : index
    %101 = vector.load %arg10[%c20_99, %c0_100] : memref<112x128xbf16, #tpu.memory_space<vmem>>, vector<80x128xbf16>
    %c6_101 = arith.constant 6 : index
    %c0_102 = arith.constant 0 : index
    %c0_103 = arith.constant 0 : index
    %102 = vector.load %arg6[%c6_101, %c0_102, %c0_103] : memref<9x128x128xbf16, #tpu.memory_space<vmem>>, vector<1x128x128xbf16>
    %103 = vector.shape_cast %102 : vector<1x128x128xbf16> to vector<128x128xbf16>
    %cst_104 = arith.constant dense<0.000000e+00> : vector<80x128xf32>
    %104 = tpu.matmul %101, %103, %cst_104 {dimension_numbers = #tpu.dot_dimension_numbers<[1], [0], [0], [1], [0, 0, 1, 1], [], []>} : vector<80x128xbf16>, vector<128x128xbf16>, vector<80x128xf32> -> vector<80x128xf32>
    %105 = arith.addf %100, %104 : vector<80x128xf32>
    %c21_105 = arith.constant 21 : index
    %c0_106 = arith.constant 0 : index
    %106 = vector.load %arg10[%c21_105, %c0_106] : memref<112x128xbf16, #tpu.memory_space<vmem>>, vector<80x128xbf16>
    %c7_107 = arith.constant 7 : index
    %c0_108 = arith.constant 0 : index
    %c0_109 = arith.constant 0 : index
    %107 = vector.load %arg6[%c7_107, %c0_108, %c0_109] : memref<9x128x128xbf16, #tpu.memory_space<vmem>>, vector<1x128x128xbf16>
    %108 = vector.shape_cast %107 : vector<1x128x128xbf16> to vector<128x128xbf16>
    %cst_110 = arith.constant dense<0.000000e+00> : vector<80x128xf32>
    %109 = tpu.matmul %106, %108, %cst_110 {dimension_numbers = #tpu.dot_dimension_numbers<[1], [0], [0], [1], [0, 0, 1, 1], [], []>} : vector<80x128xbf16>, vector<128x128xbf16>, vector<80x128xf32> -> vector<80x128xf32>
    %110 = arith.addf %105, %109 : vector<80x128xf32>
    %c22_111 = arith.constant 22 : index
    %c0_112 = arith.constant 0 : index
    %111 = vector.load %arg10[%c22_111, %c0_112] : memref<112x128xbf16, #tpu.memory_space<vmem>>, vector<80x128xbf16>
    %c8_113 = arith.constant 8 : index
    %c0_114 = arith.constant 0 : index
    %c0_115 = arith.constant 0 : index
    %112 = vector.load %arg6[%c8_113, %c0_114, %c0_115] : memref<9x128x128xbf16, #tpu.memory_space<vmem>>, vector<1x128x128xbf16>
    %113 = vector.shape_cast %112 : vector<1x128x128xbf16> to vector<128x128xbf16>
    %cst_116 = arith.constant dense<0.000000e+00> : vector<80x128xf32>
    %114 = tpu.matmul %111, %113, %cst_116 {dimension_numbers = #tpu.dot_dimension_numbers<[1], [0], [0], [1], [0, 0, 1, 1], [], []>} : vector<80x128xbf16>, vector<128x128xbf16>, vector<80x128xf32> -> vector<80x128xf32>
    %115 = arith.addf %110, %114 : vector<80x128xf32>
    %c0_117 = arith.constant 0 : index
    %c0_118 = arith.constant 0 : index
    %116 = vector.load %arg7[%c0_117, %c0_118] : memref<1x128xf32, #tpu.memory_space<vmem>>, vector<1x128xf32>
    %117 = vector.broadcast %116 : vector<1x128xf32> to vector<80x128xf32>
    %118 = arith.addf %115, %117 : vector<80x128xf32>
    %c0_119 = arith.constant 0 : index
    %c0_120 = arith.constant 0 : index
    %119 = vector.load %arg8[%c0_119, %c0_120] : memref<80x128xf32, #tpu.memory_space<vmem>>, vector<80x128xf32>
    tpu.vector_store %arg8[%c0_119, %c0_120], %118 {strides = array<i32>} : memref<80x128xf32, #tpu.memory_space<vmem>>, vector<80x128xf32>,
    return
  }
}

</mosaic_0001>

<llo_original>
// kernel: model_forward.1
$region0: #{model_forward.1}
  #allocation0 [shape = 'u32[]', space=smem, size = 0x4, offset = 0x4, fixed_abs, tag = 'smem constant byte address 0x4 - core index']
  #allocation1 [shape = 'u32[72,128]{1,0:T(1,128)}', space=vmem, size = 0x9000, scoped, tag = 'internal scratch']
  #allocation2 [shape = 'bf16[96,128]{1,0:T(8,128)(2,1)}', space=vmem, size = 0x6000, scoped, tag = 'scratch operand']
  #allocation3 [shape = 'bf16[112,128]{1,0:T(8,128)(2,1)}', space=vmem, size = 0x7000, scoped, tag = 'scratch operand']
  %s0 = inlined_call_operand.vmem [shape: bf16[64,128], index: 0, kind: input, shape index: {}]
  %s1 = inlined_call_operand.vmem [shape: bf16[60,128], index: 1, kind: input, shape index: {}]
  %s2 = inlined_call_operand.vmem [shape: bf16[128,128], index: 2, kind: input, shape index: {}]
  %s3 = inlined_call_operand.vmem [shape: f32[1,128], index: 3, kind: input, shape index: {}]
  %s4 = inlined_call_operand.hbm [shape: bf16[9,128,128], index: 4, kind: input, shape index: {}]
  %s5 = inlined_call_operand.vmem [shape: f32[1,128], index: 5, kind: input, shape index: {}]
  %s6 = inlined_call_operand.hbm [shape: bf16[9,128,128], index: 6, kind: input, shape index: {}]
  %s7 = inlined_call_operand.vmem [shape: f32[1,128], index: 7, kind: input, shape index: {}]
  %s8 = inlined_call_operand.vmem [shape: f32[80,128], index: 8, kind: output, shape index: {}]
  %s9 = sld [smem:[#allocation0]]
  $region50: #{model_forward.1} parent=0
    _
  %s11 = ssub.s32 1, %s9
  %s12 = scalar_select 0, %s11, %s9
  $region1: #{model_forward.1} parent=0
    #allocation4 [shape = 'u8[294912]{0}', space=vmem, size = 0x48000, scoped, tag = 'input window, operand 4, single buffered']
    #allocation5 [shape = 's32[1]{0}', space=sflag, size = 0x4, scoped, tag = 'scoped memory for model_forward.1']
    #allocation6 [shape = 'u8[294912]{0}', space=vmem, size = 0x48000, scoped, tag = 'input window, operand 6, single buffered']
    #allocation7 [shape = 's32[1]{0}', space=sflag, size = 0x4, scoped, tag = 'scoped memory for model_forward.1']
    %13 = vsyncpa [#allocation5], 0
    %14 = vsyncpa [#allocation7], 0
    // Predicated region
    $region2: #{model_forward.1} parent=1 // pred_check
      _
    $region3: #{model_forward.1} parent=1 // pred_check_branch
      %16 = sbr.rel (0) target = $region5
    $region4: #{model_forward.1} parent=1 // pred_region
      _
    $region5: #{model_forward.1} parent=1 // pred_fallthru
      _
    // Predicated region
    $region6: #{model_forward.1} parent=1 // pred_check
      _
    $region7: #{model_forward.1} parent=1 // pred_check_branch
      %18 = sbr.rel (0) target = $region9
    $region8: #{model_forward.1} parent=1 // pred_region
      _
    $region9: #{model_forward.1} parent=1 // pred_fallthru
      _
    // Predicated region
    $region10: #{model_forward.1} parent=1 // pred_check
      _
    $region11: #{model_forward.1} parent=1 // pred_check_branch
      %20 = sbr.rel (0) target = $region13
    $region12: #{model_forward.1} parent=1 // pred_region
      _
    $region13: #{model_forward.1} parent=1 // pred_fallthru
      _
    // Predicated region
    $region14: #{model_forward.1} parent=1 // pred_check
      _
    $region15: #{model_forward.1} parent=1 // pred_check_branch
      %22 = sbr.rel (0) target = $region17
    $region16: #{model_forward.1} parent=1 // pred_region
      _
    $region17: #{model_forward.1} parent=1 // pred_fallthru
      _
    // Predicated region
    $region18: #{model_forward.1} parent=1 // pred_check
      _
    $region19: #{model_forward.1} parent=1 // pred_check_branch
      %24 = sbr.rel (0) target = $region21
    $region20: #{model_forward.1} parent=1 // pred_region
      %26 = vsyncadd [#allocation5], 0
      %s27 = sshll.u32 %s4, 4
      %s28 = int_to_ptr.hbm [resolvable:$true] %s27
      %s29 = sshll.u32 [#allocation4], 4
      %s30 = int_to_ptr.vmem [resolvable:$true] %s29
      %35 = dma.hbm_to_vmem [thread:$0]  %s28, 9216, %s30, [#allocation5], 64, 64, 4
    $region21: #{model_forward.1} parent=1 // pred_fallthru
      _
    // Predicated region
    $region22: #{model_forward.1} parent=1 // pred_check
      _
    $region23: #{model_forward.1} parent=1 // pred_check_branch
      %37 = sbr.rel (0) target = $region25
    $region24: #{model_forward.1} parent=1 // pred_region
      _
    $region25: #{model_forward.1} parent=1 // pred_fallthru
      _
    // Predicated region
    $region26: #{model_forward.1} parent=1 // pred_check
      _
    $region27: #{model_forward.1} parent=1 // pred_check_branch
      %39 = sbr.rel (0) target = $region29
    $region28: #{model_forward.1} parent=1 // pred_region
      %41 = vsyncadd [#allocation7], 0
      %s42 = sshll.u32 %s6, 4
      %s43 = int_to_ptr.hbm [resolvable:$true] %s42
      %s44 = sshll.u32 [#allocation6], 4
      %s45 = int_to_ptr.vmem [resolvable:$true] %s44
      %50 = dma.hbm_to_vmem [thread:$0]  %s43, 9216, %s45, [#allocation7], 64, 64, 4
    $region29: #{model_forward.1} parent=1 // pred_fallthru
      _
    // Predicated region
    $region30: #{model_forward.1} parent=1 // pred_check
      _
    $region31: #{model_forward.1} parent=1 // pred_check_branch
      %52 = sbr.rel (0) target = $region33
    $region32: #{model_forward.1} parent=1 // pred_region
      _
    $region33: #{model_forward.1} parent=1 // pred_fallthru
      _
    // Predicated region
    $region34: #{model_forward.1} parent=1 // pred_check
      _
    $region35: #{model_forward.1} parent=1 // pred_check_branch
      %54 = sbr.rel (0) target = $region37
    $region36: #{model_forward.1} parent=1 // pred_region
      %56 = dma.done [#allocation5], 9216
    $region37: #{model_forward.1} parent=1 // pred_fallthru
      _
    // Predicated region
    $region38: #{model_forward.1} parent=1 // pred_check
      _
    $region39: #{model_forward.1} parent=1 // pred_check_branch
      %58 = sbr.rel (0) target = $region41
    $region40: #{model_forward.1} parent=1 // pred_region
      %60 = dma.done [#allocation7], 9216
    $region41: #{model_forward.1} parent=1 // pred_fallthru
      _
    %62 = vst [vmem:[#allocation2] sm:$0xf] 0
    %63 = vst [vmem:[#allocation2 + $0x4] sm:$0xf] 0
    %64 = vst [vmem:[#allocation2 + $0x20] sm:$0xf] 0
    %65 = vst [vmem:[#allocation2 + $0x24] sm:$0xf] 0
    %66 = vst [vmem:[#allocation2 + $0x28] sm:$0xf] 0
    %67 = vst [vmem:[#allocation2 + $0x2c] sm:$0xf] 0
    %68 = vst [vmem:[#allocation3] sm:$0xf] 0
    %69 = vst [vmem:[#allocation3 + $0x4] sm:$0xf] 0
    %70 = vst [vmem:[#allocation3 + $0x8] sm:$0xf] 0
    %71 = vst [vmem:[#allocation3 + $0xc] sm:$0xf] 0
    %72 = vst [vmem:[#allocation3 + $0x28] sm:$0xf] 0
    %73 = vst [vmem:[#allocation3 + $0x2c] sm:$0xf] 0
    %74 = vst [vmem:[#allocation3 + $0x30] sm:$0xf] 0
    %75 = vst [vmem:[#allocation3 + $0x34] sm:$0xf] 0
    %v76 = vld [vmem:[%s1] sm:$0xf]
    %v77 = vld [vmem:[%s1 + $0x4] sm:$0xf]
    %v78 = vld [vmem:[%s1 + $0x8] sm:$0xf]
    %v79 = vld [vmem:[%s1 + $0xc] sm:$0xf]
    %v80 = vld [vmem:[%s1 + $0x10] sm:$0xf]
    %v81 = vld [vmem:[%s1 + $0x14] sm:$0xf]
    %v82 = vld [vmem:[%s1 + $0x18] sm:$0xf]
    %v83 = vld [vmem:[%s1 + $0x1c] sm:$0x3]
    %v84 = vld [vmem:[%s0] sm:$0xf]
    %v85 = vld [vmem:[%s0 + $0x4] sm:$0xf]
    %v86 = vld [vmem:[%s0 + $0x8] sm:$0xf]
    %v87 = vld [vmem:[%s0 + $0xc] sm:$0xf]
    %v88 = vld [vmem:[%s0 + $0x10] sm:$0xf]
    %v89 = vld [vmem:[%s0 + $0x14] sm:$0xf]
    %v90 = vld [vmem:[%s0 + $0x18] sm:$0xf]
    %v91 = vld [vmem:[%s0 + $0x1c] sm:$0xf]
    %v92 = vld [vmem:[%s2] sm:$0xf]
    %v93 = vld [vmem:[%s2 + $0x4] sm:$0xf]
    %v94 = vld [vmem:[%s2 + $0x8] sm:$0xf]
    %v95 = vld [vmem:[%s2 + $0xc] sm:$0xf]
    %v96 = vld [vmem:[%s2 + $0x10] sm:$0xf]
    %v97 = vld [vmem:[%s2 + $0x14] sm:$0xf]
    %v98 = vld [vmem:[%s2 + $0x18] sm:$0xf]
    %v99 = vld [vmem:[%s2 + $0x1c] sm:$0xf]
    %v100 = vld [vmem:[%s2 + $0x20] sm:$0xf]
    %v101 = vld [vmem:[%s2 + $0x24] sm:$0xf]
    %v102 = vld [vmem:[%s2 + $0x28] sm:$0xf]
    %v103 = vld [vmem:[%s2 + $0x2c] sm:$0xf]
    %v104 = vld [vmem:[%s2 + $0x30] sm:$0xf]
    %v105 = vld [vmem:[%s2 + $0x34] sm:$0xf]
    %v106 = vld [vmem:[%s2 + $0x38] sm:$0xf]
    %v107 = vld [vmem:[%s2 + $0x3c] sm:$0xf]
    %v108 = vld [vmem:[%s3] sm:$0x1]
    %v110 = vperm.slane %v108, 0
    %v120 = vunpack.c.l.b16 %v84
    %v121 = vunpack.c.l.b16 %v85
    %v122 = vunpack.c.l.b16 %v86
    %v123 = vunpack.c.l.b16 %v87
    %v124 = vunpack.c.l.b16 %v88
    %v125 = vunpack.c.l.b16 %v89
    %v126 = vunpack.c.l.b16 %v90
    %v127 = vunpack.c.l.b16 %v91
    %v128 = vpack.c.b16 %v121, %v120
    %v129 = vpack.c.b16 %v123, %v122
    %v130 = vpack.c.b16 %v125, %v124
    %v131 = vpack.c.b16 %v127, %v126
    %v152 = vunpack.c.l.b16 %v92
    %v153 = vunpack.c.l.b16 %v93
    %v154 = vunpack.c.l.b16 %v94
    %v155 = vunpack.c.l.b16 %v95
    %v156 = vunpack.c.l.b16 %v96
    %v157 = vunpack.c.l.b16 %v97
    %v158 = vunpack.c.l.b16 %v98
    %v159 = vunpack.c.l.b16 %v99
    %v160 = vunpack.c.l.b16 %v100
    %v161 = vunpack.c.l.b16 %v101
    %v162 = vunpack.c.l.b16 %v102
    %v163 = vunpack.c.l.b16 %v103
    %v164 = vunpack.c.l.b16 %v104
    %v165 = vunpack.c.l.b16 %v105
    %v166 = vunpack.c.l.b16 %v106
    %v167 = vunpack.c.l.b16 %v107
    %v168 = vpack.c.b16 %v153, %v152
    %v169 = vpack.c.b16 %v155, %v154
    %v170 = vpack.c.b16 %v157, %v156
    %v171 = vpack.c.b16 %v159, %v158
    %v172 = vpack.c.b16 %v161, %v160
    %v173 = vpack.c.b16 %v163, %v162
    %v174 = vpack.c.b16 %v165, %v164
    %v175 = vpack.c.b16 %v167, %v166
    %184 = vmatpush.bf16.msra.mxu0 %v175
    %185 = vmatpush.bf16.msra.mxu0 %v174
    %186 = vmatpush.bf16.msra.mxu0 %v173
    %187 = vmatpush.bf16.msra.mxu0 %v172
    %188 = vmatpush.bf16.msra.mxu0 %v171
    %189 = vmatpush.bf16.msra.mxu0 %v170
    %190 = vmatpush.bf16.msra.mxu0 %v169
    %191 = vmatpush.bf16.msra.mxu0 %v168
    %192 = vmatmul.bf16.gmra.mxu0 %v128
    %v193 = vpop.f32.mrf.mxu0
    %v194 = vadd.f32 %v110, %v193
    %v195 = vpop.f32.mrf.mxu0
    %v196 = vadd.f32 %v110, %v195
    %197 = vmatmul.bf16.gmra.mxu0 %v129
    %v198 = vpop.f32.mrf.mxu0
    %v199 = vadd.f32 %v110, %v198
    %v200 = vpop.f32.mrf.mxu0
    %v201 = vadd.f32 %v110, %v200
    %202 = vmatmul.bf16.gmra.mxu0 %v130
    %v203 = vpop.f32.mrf.mxu0
    %v204 = vadd.f32 %v110, %v203
    %v205 = vpop.f32.mrf.mxu0
    %v206 = vadd.f32 %v110, %v205
    %207 = vmatmul.bf16.gmra.mxu0 %v131
    %v208 = vpop.f32.mrf.mxu0
    %v209 = vadd.f32 %v110, %v208
    %v210 = vpop.f32.mrf.mxu0
    %v211 = vadd.f32 %v110, %v210
    %212 = vdwg.mxu0
    %v213 = vunpack.c.l.bf16 %v76
    %v214 = vunpack.c.l.bf16 %v77
    %v215 = vunpack.c.l.bf16 %v78
    %v216 = vunpack.c.l.bf16 %v79
    %v217 = vunpack.c.l.bf16 %v80
    %v218 = vunpack.c.l.bf16 %v81
    %v219 = vunpack.c.l.bf16 %v82
    %v220 = vunpack.c.l.bf16 %v83
    %v221 = vmul.f32 %v194, %v213
    %v222 = vmul.f32 %v196, %v214
    %v223 = vmul.f32 %v199, %v215
    %v224 = vmul.f32 %v201, %v216
    %v225 = vmul.f32 %v204, %v217
    %v226 = vmul.f32 %v206, %v218
    %v227 = vmul.f32 %v209, %v219
    %v228 = vmul.f32 %v211, %v220
    %v229 = vpack.c.bf16 %v221, %v221
    %v230 = vpack.c.bf16 %v222, %v222
    %v231 = vpack.c.bf16 %v223, %v223
    %v232 = vpack.c.bf16 %v224, %v224
    %v233 = vpack.c.bf16 %v225, %v225
    %v234 = vpack.c.bf16 %v226, %v226
    %v235 = vpack.c.bf16 %v227, %v227
    %v236 = vpack.c.bf16 %v228, %v228
    %vm237 = vsmask.f32 1280
    %vm238 = vsmask.f32 5392
    %vm239 = vmor %vm237, %vm238
    %v241 = vshrl.u32 %v229, 16
    %v243 = vrot.slane %v241, 6
    %v244 = vshll.u32 %v229, 16
    %v246 = vrot.slane %v244, 7
    %v247 = vor.u32 %v243, %v246
    %v248 = vrot.slane %v247, 4
    %v250 = vshrl.u32 %v230, 16
    %v252 = vrot.slane %v250, 6
    %v253 = vshll.u32 %v230, 16
    %v255 = vrot.slane %v253, 7
    %v256 = vor.u32 %v252, %v255
    %v257 = vsel %vm239, %v248, %v256
    %v258 = vrot.slane %v256, 4
    %v260 = vshrl.u32 %v231, 16
    %v262 = vrot.slane %v260, 6
    %v263 = vshll.u32 %v231, 16
    %v265 = vrot.slane %v263, 7
    %v266 = vor.u32 %v262, %v265
    %v267 = vsel %vm239, %v258, %v266
    %v268 = vrot.slane %v266, 4
    %v270 = vshrl.u32 %v232, 16
    %v272 = vrot.slane %v270, 6
    %v273 = vshll.u32 %v232, 16
    %v275 = vrot.slane %v273, 7
    %v276 = vor.u32 %v272, %v275
    %v277 = vsel %vm239, %v268, %v276
    %v278 = vrot.slane %v276, 4
    %v280 = vshrl.u32 %v233, 16
    %v282 = vrot.slane %v280, 6
    %v283 = vshll.u32 %v233, 16
    %v285 = vrot.slane %v283, 7
    %v286 = vor.u32 %v282, %v285
    %v287 = vsel %vm239, %v278, %v286
    %v288 = vrot.slane %v286, 4
    %v290 = vshrl.u32 %v234, 16
    %v292 = vrot.slane %v290, 6
    %v293 = vshll.u32 %v234, 16
    %v295 = vrot.slane %v293, 7
    %v296 = vor.u32 %v292, %v295
    %v297 = vsel %vm239, %v288, %v296
    %v298 = vrot.slane %v296, 4
    %v300 = vshrl.u32 %v235, 16
    %v302 = vrot.slane %v300, 6
    %v303 = vshll.u32 %v235, 16
    %v305 = vrot.slane %v303, 7
    %v306 = vor.u32 %v302, %v305
    %v307 = vsel %vm239, %v298, %v306
    %v308 = vrot.slane %v306, 4
    %v310 = vshrl.u32 %v236, 16
    %v312 = vrot.slane %v310, 6
    %v313 = vshll.u32 %v236, 16
    %v315 = vrot.slane %v313, 7
    %v316 = vor.u32 %v312, %v315
    %v317 = vsel %vm239, %v308, %v316
    %vm326 = vcmask 1043457
    %vm327 = vsmask.f32 7942
    %vm328 = vmand %vm326, %vm327
    %v329 = vld [vmem:[#allocation2 + $0x4] sm:$0xe]
    %v330 = vsel %vm328, %v247, %v329
    %331 = vst [vmem:[#allocation2 + $0x4] sm:$0xe] %v330
    %332 = vst [vmem:[#allocation2 + $0x8] sm:$0xf] %v257
    %333 = vst [vmem:[#allocation2 + $0xc] sm:$0xf] %v267
    %334 = vst [vmem:[#allocation2 + $0x10] sm:$0xf] %v277
    %335 = vst [vmem:[#allocation2 + $0x14] sm:$0xf] %v287
    %336 = vst [vmem:[#allocation2 + $0x18] sm:$0xf] %v297
    %337 = vst [vmem:[#allocation2 + $0x1c] sm:$0xf] %v307
    %vm338 = vcmask 1043456
    %vm339 = vsmask.f32 3328
    %vm340 = vmand %vm338, %vm339
    %v341 = vld [vmem:[#allocation2 + $0x20] sm:$0xf]
    %v342 = vsel %vm340, %v317, %v341
    %343 = vst [vmem:[#allocation2 + $0x20] sm:$0xf] %v342
    %v344 = vld [vmem:[#allocation2] sm:$0xf]
    %v345 = vld [vmem:[#allocation2 + $0x4] sm:$0xf]
    %v346 = vld [vmem:[#allocation2 + $0x8] sm:$0xf]
    %v347 = vld [vmem:[#allocation2 + $0xc] sm:$0xf]
    %v348 = vld [vmem:[#allocation2 + $0x10] sm:$0xf]
    %v349 = vld [vmem:[#allocation2 + $0x14] sm:$0xf]
    %v350 = vld [vmem:[#allocation2 + $0x18] sm:$0xf]
    %v351 = vld [vmem:[#allocation2 + $0x1c] sm:$0xf]
    %v352 = vld [vmem:[#allocation4] sm:$0xf]
    %v353 = vld [vmem:[#allocation4 + $0x4] sm:$0xf]
    %v354 = vld [vmem:[#allocation4 + $0x8] sm:$0xf]
    %v355 = vld [vmem:[#allocation4 + $0xc] sm:$0xf]
    %v356 = vld [vmem:[#allocation4 + $0x10] sm:$0xf]
    %v357 = vld [vmem:[#allocation4 + $0x14] sm:$0xf]
    %v358 = vld [vmem:[#allocation4 + $0x18] sm:$0xf]
    %v359 = vld [vmem:[#allocation4 + $0x1c] sm:$0xf]
    %v360 = vld [vmem:[#allocation4 + $0x20] sm:$0xf]
    %v361 = vld [vmem:[#allocation4 + $0x24] sm:$0xf]
    %v362 = vld [vmem:[#allocation4 + $0x28] sm:$0xf]
    %v363 = vld [vmem:[#allocation4 + $0x2c] sm:$0xf]
    %v364 = vld [vmem:[#allocation4 + $0x30] sm:$0xf]
    %v365 = vld [vmem:[#allocation4 + $0x34] sm:$0xf]
    %v366 = vld [vmem:[#allocation4 + $0x38] sm:$0xf]
    %v367 = vld [vmem:[#allocation4 + $0x3c] sm:$0xf]
    %v368 = vld [vmem:[#allocation2 + $0x20] sm:$0x1]
    %s369 = scalar_lea.vmem [#allocation4], 64
    %v370 = vld [vmem:[%s369] sm:$0xf]
    %v371 = vld [vmem:[%s369 + $0x4] sm:$0xf]
    %v372 = vld [vmem:[%s369 + $0x8] sm:$0xf]
    %v373 = vld [vmem:[%s369 + $0xc] sm:$0xf]
    %v374 = vld [vmem:[%s369 + $0x10] sm:$0xf]
    %v375 = vld [vmem:[%s369 + $0x14] sm:$0xf]
    %v376 = vld [vmem:[%s369 + $0x18] sm:$0xf]
    %v377 = vld [vmem:[%s369 + $0x1c] sm:$0xf]
    %v378 = vld [vmem:[%s369 + $0x20] sm:$0xf]
    %v379 = vld [vmem:[%s369 + $0x24] sm:$0xf]
    %v380 = vld [vmem:[%s369 + $0x28] sm:$0xf]
    %v381 = vld [vmem:[%s369 + $0x2c] sm:$0xf]
    %v382 = vld [vmem:[%s369 + $0x30] sm:$0xf]
    %v383 = vld [vmem:[%s369 + $0x34] sm:$0xf]
    %v384 = vld [vmem:[%s369 + $0x38] sm:$0xf]
    %v385 = vld [vmem:[%s369 + $0x3c] sm:$0xf]
    %v395 = vunpack.c.l.b16 %v344
    %v396 = vunpack.c.l.b16 %v345
    %v397 = vunpack.c.l.b16 %v346
    %v398 = vunpack.c.l.b16 %v347
    %v399 = vunpack.c.l.b16 %v348
    %v400 = vunpack.c.l.b16 %v349
    %v401 = vunpack.c.l.b16 %v350
    %v402 = vunpack.c.l.b16 %v351
    %v403 = vunpack.c.l.b16 %v368
    %v404 = vpack.c.b16 %v396, %v395
    %v405 = vpack.c.b16 %v398, %v397
    %v406 = vpack.c.b16 %v400, %v399
    %v407 = vpack.c.b16 %v402, %v401
    %v408 = vpack.c.b16 %v403, %v403
    %vm409 = vsmask.f32 7424
    %v411 = vshrl.u32 %v404, 16
    %v413 = vshll.u32 %v404, 16
    %v415 = vrot.slane %v413, 1
    %v416 = vor.u32 %v411, %v415
    %v418 = vshll.u32 %v405, 16
    %v420 = vrot.slane %v418, 1
    %v421 = vsel %vm409, %v416, %v420
    %v422 = vshrl.u32 %v405, 16
    %v424 = vor.u32 %v422, %v420
    %v426 = vshll.u32 %v406, 16
    %v428 = vrot.slane %v426, 1
    %v429 = vsel %vm409, %v424, %v428
    %v430 = vshrl.u32 %v406, 16
    %v432 = vor.u32 %v430, %v428
    %v434 = vshll.u32 %v407, 16
    %v436 = vrot.slane %v434, 1
    %v437 = vsel %vm409, %v432, %v436
    %v438 = vshrl.u32 %v407, 16
    %v440 = vor.u32 %v438, %v436
    %v442 = vshll.u32 %v408, 16
    %v444 = vrot.slane %v442, 1
    %v445 = vsel %vm409, %v440, %v444
    %v466 = vunpack.c.l.b16 %v370
    %v467 = vunpack.c.l.b16 %v371
    %v468 = vunpack.c.l.b16 %v372
    %v469 = vunpack.c.l.b16 %v373
    %v470 = vunpack.c.l.b16 %v374
    %v471 = vunpack.c.l.b16 %v375
    %v472 = vunpack.c.l.b16 %v376
    %v473 = vunpack.c.l.b16 %v377
    %v474 = vunpack.c.l.b16 %v378
    %v475 = vunpack.c.l.b16 %v379
    %v476 = vunpack.c.l.b16 %v380
    %v477 = vunpack.c.l.b16 %v381
    %v478 = vunpack.c.l.b16 %v382
    %v479 = vunpack.c.l.b16 %v383
    %v480 = vunpack.c.l.b16 %v384
    %v481 = vunpack.c.l.b16 %v385
    %v482 = vpack.c.b16 %v467, %v466
    %v483 = vpack.c.b16 %v469, %v468
    %v484 = vpack.c.b16 %v471, %v470
    %v485 = vpack.c.b16 %v473, %v472
    %v486 = vpack.c.b16 %v475, %v474
    %v487 = vpack.c.b16 %v477, %v476
    %v488 = vpack.c.b16 %v479, %v478
    %v489 = vpack.c.b16 %v481, %v480
    %498 = vmatpush.bf16.msra.mxu0 %v489
    %499 = vmatpush.bf16.msra.mxu0 %v488
    %500 = vmatpush.bf16.msra.mxu0 %v487
    %501 = vmatpush.bf16.msra.mxu0 %v486
    %502 = vmatpush.bf16.msra.mxu0 %v485
    %503 = vmatpush.bf16.msra.mxu0 %v484
    %504 = vmatpush.bf16.msra.mxu0 %v483
    %505 = vmatpush.bf16.msra.mxu0 %v482
    %506 = vmatmul.bf16.gmra.mxu0 %v421
    %v507 = vpop.f32.mrf.mxu0
    %v508 = vadd.f32 0.0, %v507
    %v509 = vpop.f32.mrf.mxu0
    %v510 = vadd.f32 0.0, %v509
    %511 = vmatmul.bf16.gmra.mxu0 %v429
    %v512 = vpop.f32.mrf.mxu0
    %v513 = vadd.f32 0.0, %v512
    %v514 = vpop.f32.mrf.mxu0
    %v515 = vadd.f32 0.0, %v514
    %516 = vmatmul.bf16.gmra.mxu0 %v437
    %v517 = vpop.f32.mrf.mxu0
    %v518 = vadd.f32 0.0, %v517
    %v519 = vpop.f32.mrf.mxu0
    %v520 = vadd.f32 0.0, %v519
    %521 = vmatmul.bf16.gmra.mxu0 %v445
    %v522 = vpop.f32.mrf.mxu0
    %v523 = vadd.f32 0.0, %v522
    %v524 = vpop.f32.mrf.mxu0
    %v525 = vadd.f32 0.0, %v524
    %526 = vdwg.mxu0
    %v547 = vunpack.c.l.b16 %v352
    %v548 = vunpack.c.l.b16 %v353
    %v549 = vunpack.c.l.b16 %v354
    %v550 = vunpack.c.l.b16 %v355
    %v551 = vunpack.c.l.b16 %v356
    %v552 = vunpack.c.l.b16 %v357
    %v553 = vunpack.c.l.b16 %v358
    %v554 = vunpack.c.l.b16 %v359
    %v555 = vunpack.c.l.b16 %v360
    %v556 = vunpack.c.l.b16 %v361
    %v557 = vunpack.c.l.b16 %v362
    %v558 = vunpack.c.l.b16 %v363
    %v559 = vunpack.c.l.b16 %v364
    %v560 = vunpack.c.l.b16 %v365
    %v561 = vunpack.c.l.b16 %v366
    %v562 = vunpack.c.l.b16 %v367
    %v563 = vpack.c.b16 %v548, %v547
    %v564 = vpack.c.b16 %v550, %v549
    %v565 = vpack.c.b16 %v552, %v551
    %v566 = vpack.c.b16 %v554, %v553
    %v567 = vpack.c.b16 %v556, %v555
    %v568 = vpack.c.b16 %v558, %v557
    %v569 = vpack.c.b16 %v560, %v559
    %v570 = vpack.c.b16 %v562, %v561
    %579 = vmatpush.bf16.msra.mxu0 %v570
    %580 = vmatpush.bf16.msra.mxu0 %v569
    %581 = vmatpush.bf16.msra.mxu0 %v568
    %582 = vmatpush.bf16.msra.mxu0 %v567
    %583 = vmatpush.bf16.msra.mxu0 %v566
    %584 = vmatpush.bf16.msra.mxu0 %v565
    %585 = vmatpush.bf16.msra.mxu0 %v564
    %586 = vmatpush.bf16.msra.mxu0 %v563
    %587 = vmatmul.bf16.gmra.mxu0 %v404
    %v588 = vpop.f32.mrf.mxu0
    %v589 = vadd.f32 %v508, %v588
    %v590 = vpop.f32.mrf.mxu0
    %v591 = vadd.f32 %v510, %v590
    %592 = vmatmul.bf16.gmra.mxu0 %v405
    %v593 = vpop.f32.mrf.mxu0
    %v594 = vadd.f32 %v513, %v593
    %v595 = vpop.f32.mrf.mxu0
    %v596 = vadd.f32 %v515, %v595
    %597 = vmatmul.bf16.gmra.mxu0 %v406
    %v598 = vpop.f32.mrf.mxu0
    %v599 = vadd.f32 %v518, %v598
    %v600 = vpop.f32.mrf.mxu0
    %v601 = vadd.f32 %v520, %v600
    %602 = vmatmul.bf16.gmra.mxu0 %v407
    %v603 = vpop.f32.mrf.mxu0
    %v604 = vadd.f32 %v523, %v603
    %v605 = vpop.f32.mrf.mxu0
    %v606 = vadd.f32 %v525, %v605
    %607 = vdwg.mxu0
    %v608 = vld [vmem:[#allocation2] sm:$0xe]
    %s609 = scalar_lea.vmem [#allocation4], 128
    %v610 = vld [vmem:[%s609] sm:$0xf]
    %v611 = vld [vmem:[%s609 + $0x4] sm:$0xf]
    %v612 = vld [vmem:[%s609 + $0x8] sm:$0xf]
    %v613 = vld [vmem:[%s609 + $0xc] sm:$0xf]
    %v614 = vld [vmem:[%s609 + $0x10] sm:$0xf]
    %v615 = vld [vmem:[%s609 + $0x14] sm:$0xf]
    %v616 = vld [vmem:[%s609 + $0x18] sm:$0xf]
    %v617 = vld [vmem:[%s609 + $0x1c] sm:$0xf]
    %v618 = vld [vmem:[%s609 + $0x20] sm:$0xf]
    %v619 = vld [vmem:[%s609 + $0x24] sm:$0xf]
    %v620 = vld [vmem:[%s609 + $0x28] sm:$0xf]
    %v621 = vld [vmem:[%s609 + $0x2c] sm:$0xf]
    %v622 = vld [vmem:[%s609 + $0x30] sm:$0xf]
    %v623 = vld [vmem:[%s609 + $0x34] sm:$0xf]
    %v624 = vld [vmem:[%s609 + $0x38] sm:$0xf]
    %v625 = vld [vmem:[%s609 + $0x3c] sm:$0xf]
    %v627 = vunpack.c.l.b16 %v608
    %v628 = vpack.c.b16 %v396, %v627
    %vm629 = vcmask 1046528
    %v630 = vrot.slane %v628, 1
    %v631 = vrot.slane %v405, 1
    %v632 = vsel %vm629, %v630, %v631
    %v633 = vrot.slane %v406, 1
    %v634 = vsel %vm629, %v631, %v633
    %v635 = vrot.slane %v407, 1
    %v636 = vsel %vm629, %v633, %v635
    %v637 = vrot.slane %v408, 1
    %v638 = vsel %vm629, %v635, %v637
    %v659 = vunpack.c.l.b16 %v610
    %v660 = vunpack.c.l.b16 %v611
    %v661 = vunpack.c.l.b16 %v612
    %v662 = vunpack.c.l.b16 %v613
    %v663 = vunpack.c.l.b16 %v614
    %v664 = vunpack.c.l.b16 %v615
    %v665 = vunpack.c.l.b16 %v616
    %v666 = vunpack.c.l.b16 %v617
    %v667 = vunpack.c.l.b16 %v618
    %v668 = vunpack.c.l.b16 %v619
    %v669 = vunpack.c.l.b16 %v620
    %v670 = vunpack.c.l.b16 %v621
    %v671 = vunpack.c.l.b16 %v622
    %v672 = vunpack.c.l.b16 %v623
    %v673 = vunpack.c.l.b16 %v624
    %v674 = vunpack.c.l.b16 %v625
    %v675 = vpack.c.b16 %v660, %v659
    %v676 = vpack.c.b16 %v662, %v661
    %v677 = vpack.c.b16 %v664, %v663
    %v678 = vpack.c.b16 %v666, %v665
    %v679 = vpack.c.b16 %v668, %v667
    %v680 = vpack.c.b16 %v670, %v669
    %v681 = vpack.c.b16 %v672, %v671
    %v682 = vpack.c.b16 %v674, %v673
    %691 = vmatpush.bf16.msra.mxu0 %v682
    %692 = vmatpush.bf16.msra.mxu0 %v681
    %693 = vmatpush.bf16.msra.mxu0 %v680
    %694 = vmatpush.bf16.msra.mxu0 %v679
    %695 = vmatpush.bf16.msra.mxu0 %v678
    %696 = vmatpush.bf16.msra.mxu0 %v677
    %697 = vmatpush.bf16.msra.mxu0 %v676
    %698 = vmatpush.bf16.msra.mxu0 %v675
    %699 = vmatmul.bf16.gmra.mxu0 %v632
    %v700 = vpop.f32.mrf.mxu0
    %v701 = vadd.f32 0.0, %v700
    %v702 = vpop.f32.mrf.mxu0
    %v703 = vadd.f32 0.0, %v702
    %704 = vmatmul.bf16.gmra.mxu0 %v634
    %v705 = vpop.f32.mrf.mxu0
    %v706 = vadd.f32 0.0, %v705
    %v707 = vpop.f32.mrf.mxu0
    %v708 = vadd.f32 0.0, %v707
    %709 = vmatmul.bf16.gmra.mxu0 %v636
    %v710 = vpop.f32.mrf.mxu0
    %v711 = vadd.f32 0.0, %v710
    %v712 = vpop.f32.mrf.mxu0
    %v713 = vadd.f32 0.0, %v712
    %714 = vmatmul.bf16.gmra.mxu0 %v638
    %v715 = vpop.f32.mrf.mxu0
    %v716 = vadd.f32 0.0, %v715
    %v717 = vpop.f32.mrf.mxu0
    %v718 = vadd.f32 0.0, %v717
    %719 = vdwg.mxu0
    %v720 = vadd.f32 %v589, %v701
    %v721 = vadd.f32 %v591, %v703
    %v722 = vadd.f32 %v594, %v706
    %v723 = vadd.f32 %v596, %v708
    %v724 = vadd.f32 %v599, %v711
    %v725 = vadd.f32 %v601, %v713
    %v726 = vadd.f32 %v604, %v716
    %v727 = vadd.f32 %v606, %v718
    %v728 = vld [vmem:[#allocation2 + $0x4] sm:$0xe]
    %v729 = vld [vmem:[#allocation2 + $0x8] sm:$0xf]
    %v730 = vld [vmem:[#allocation2 + $0xc] sm:$0xf]
    %v731 = vld [vmem:[#allocation2 + $0x10] sm:$0xf]
    %v732 = vld [vmem:[#allocation2 + $0x14] sm:$0xf]
    %v733 = vld [vmem:[#allocation2 + $0x18] sm:$0xf]
    %v734 = vld [vmem:[#allocation2 + $0x1c] sm:$0xf]
    %v735 = vld [vmem:[#allocation2 + $0x20] sm:$0xf]
    %v736 = vld [vmem:[#allocation2 + $0x24] sm:$0x1]
    %s737 = scalar_lea.vmem [#allocation4], 192
    %v738 = vld [vmem:[%s737] sm:$0xf]
    %v739 = vld [vmem:[%s737 + $0x4] sm:$0xf]
    %v740 = vld [vmem:[%s737 + $0x8] sm:$0xf]
    %v741 = vld [vmem:[%s737 + $0xc] sm:$0xf]
    %v742 = vld [vmem:[%s737 + $0x10] sm:$0xf]
    %v743 = vld [vmem:[%s737 + $0x14] sm:$0xf]
    %v744 = vld [vmem:[%s737 + $0x18] sm:$0xf]
    %v745 = vld [vmem:[%s737 + $0x1c] sm:$0xf]
    %v746 = vld [vmem:[%s737 + $0x20] sm:$0xf]
    %v747 = vld [vmem:[%s737 + $0x24] sm:$0xf]
    %v748 = vld [vmem:[%s737 + $0x28] sm:$0xf]
    %v749 = vld [vmem:[%s737 + $0x2c] sm:$0xf]
    %v750 = vld [vmem:[%s737 + $0x30] sm:$0xf]
    %v751 = vld [vmem:[%s737 + $0x34] sm:$0xf]
    %v752 = vld [vmem:[%s737 + $0x38] sm:$0xf]
    %v753 = vld [vmem:[%s737 + $0x3c] sm:$0xf]
    %v763 = vunpack.c.l.b16 %v728
    %v764 = vunpack.c.l.b16 %v729
    %v765 = vunpack.c.l.b16 %v730
    %v766 = vunpack.c.l.b16 %v731
    %v767 = vunpack.c.l.b16 %v732
    %v768 = vunpack.c.l.b16 %v733
    %v769 = vunpack.c.l.b16 %v734
    %v770 = vunpack.c.l.b16 %v735
    %v771 = vunpack.c.l.b16 %v736
    %v772 = vpack.c.b16 %v764, %v763
    %v773 = vpack.c.b16 %v766, %v765
    %v774 = vpack.c.b16 %v768, %v767
    %v775 = vpack.c.b16 %v770, %v769
    %v776 = vpack.c.b16 %v771, %v771
    %v777 = vrot.slane %v772, 1
    %v778 = vrot.slane %v773, 1
    %v779 = vsel %vm629, %v777, %v778
    %v780 = vrot.slane %v774, 1
    %v781 = vsel %vm629, %v778, %v780
    %v782 = vrot.slane %v775, 1
    %v783 = vsel %vm629, %v780, %v782
    %v784 = vrot.slane %v776, 1
    %v785 = vsel %vm629, %v782, %v784
    %v806 = vunpack.c.l.b16 %v738
    %v807 = vunpack.c.l.b16 %v739
    %v808 = vunpack.c.l.b16 %v740
    %v809 = vunpack.c.l.b16 %v741
    %v810 = vunpack.c.l.b16 %v742
    %v811 = vunpack.c.l.b16 %v743
    %v812 = vunpack.c.l.b16 %v744
    %v813 = vunpack.c.l.b16 %v745
    %v814 = vunpack.c.l.b16 %v746
    %v815 = vunpack.c.l.b16 %v747
    %v816 = vunpack.c.l.b16 %v748
    %v817 = vunpack.c.l.b16 %v749
    %v818 = vunpack.c.l.b16 %v750
    %v819 = vunpack.c.l.b16 %v751
    %v820 = vunpack.c.l.b16 %v752
    %v821 = vunpack.c.l.b16 %v753
    %v822 = vpack.c.b16 %v807, %v806
    %v823 = vpack.c.b16 %v809, %v808
    %v824 = vpack.c.b16 %v811, %v810
    %v825 = vpack.c.b16 %v813, %v812
    %v826 = vpack.c.b16 %v815, %v814
    %v827 = vpack.c.b16 %v817, %v816
    %v828 = vpack.c.b16 %v819, %v818
    %v829 = vpack.c.b16 %v821, %v820
    %838 = vmatpush.bf16.msra.mxu0 %v829
    %839 = vmatpush.bf16.msra.mxu0 %v828
    %840 = vmatpush.bf16.msra.mxu0 %v827
    %841 = vmatpush.bf16.msra.mxu0 %v826
    %842 = vmatpush.bf16.msra.mxu0 %v825
    %843 = vmatpush.bf16.msra.mxu0 %v824
    %844 = vmatpush.bf16.msra.mxu0 %v823
    %845 = vmatpush.bf16.msra.mxu0 %v822
    %846 = vmatmul.bf16.gmra.mxu0 %v779
    %v847 = vpop.f32.mrf.mxu0
    %v848 = vadd.f32 0.0, %v847
    %v849 = vpop.f32.mrf.mxu0
    %v850 = vadd.f32 0.0, %v849
    %851 = vmatmul.bf16.gmra.mxu0 %v781
    %v852 = vpop.f32.mrf.mxu0
    %v853 = vadd.f32 0.0, %v852
    %v854 = vpop.f32.mrf.mxu0
    %v855 = vadd.f32 0.0, %v854
    %856 = vmatmul.bf16.gmra.mxu0 %v783
    %v857 = vpop.f32.mrf.mxu0
    %v858 = vadd.f32 0.0, %v857
    %v859 = vpop.f32.mrf.mxu0
    %v860 = vadd.f32 0.0, %v859
    %861 = vmatmul.bf16.gmra.mxu0 %v785
    %v862 = vpop.f32.mrf.mxu0
    %v863 = vadd.f32 0.0, %v862
    %v864 = vpop.f32.mrf.mxu0
    %v865 = vadd.f32 0.0, %v864
    %866 = vdwg.mxu0
    %v867 = vadd.f32 %v720, %v848
    %v868 = vadd.f32 %v721, %v850
    %v869 = vadd.f32 %v722, %v853
    %v870 = vadd.f32 %v723, %v855
    %v871 = vadd.f32 %v724, %v858
    %v872 = vadd.f32 %v725, %v860
    %v873 = vadd.f32 %v726, %v863
    %v874 = vadd.f32 %v727, %v865
    %v875 = vld [vmem:[#allocation2 + $0x24] sm:$0x3]
    %s876 = scalar_lea.vmem [#allocation4], 256
    %v877 = vld [vmem:[%s876] sm:$0xf]
    %v878 = vld [vmem:[%s876 + $0x4] sm:$0xf]
    %v879 = vld [vmem:[%s876 + $0x8] sm:$0xf]
    %v880 = vld [vmem:[%s876 + $0xc] sm:$0xf]
    %v881 = vld [vmem:[%s876 + $0x10] sm:$0xf]
    %v882 = vld [vmem:[%s876 + $0x14] sm:$0xf]
    %v883 = vld [vmem:[%s876 + $0x18] sm:$0xf]
    %v884 = vld [vmem:[%s876 + $0x1c] sm:$0xf]
    %v885 = vld [vmem:[%s876 + $0x20] sm:$0xf]
    %v886 = vld [vmem:[%s876 + $0x24] sm:$0xf]
    %v887 = vld [vmem:[%s876 + $0x28] sm:$0xf]
    %v888 = vld [vmem:[%s876 + $0x2c] sm:$0xf]
    %v889 = vld [vmem:[%s876 + $0x30] sm:$0xf]
    %v890 = vld [vmem:[%s876 + $0x34] sm:$0xf]
    %v891 = vld [vmem:[%s876 + $0x38] sm:$0xf]
    %v892 = vld [vmem:[%s876 + $0x3c] sm:$0xf]
    %v894 = vunpack.c.l.b16 %v875
    %v895 = vpack.c.b16 %v894, %v894
    %vm896 = vsmask.f32 6400
    %v898 = vshrl.u32 %v772, 16
    %v900 = vrot.slane %v898, 1
    %v901 = vshll.u32 %v772, 16
    %v903 = vrot.slane %v901, 2
    %v904 = vor.u32 %v900, %v903
    %v906 = vshrl.u32 %v773, 16
    %v908 = vrot.slane %v906, 1
    %v909 = vshll.u32 %v773, 16
    %v911 = vrot.slane %v909, 2
    %v912 = vor.u32 %v908, %v911
    %v913 = vsel %vm896, %v904, %v912
    %v915 = vshrl.u32 %v774, 16
    %v917 = vrot.slane %v915, 1
    %v918 = vshll.u32 %v774, 16
    %v920 = vrot.slane %v918, 2
    %v921 = vor.u32 %v917, %v920
    %v922 = vsel %vm896, %v912, %v921
    %v924 = vshrl.u32 %v775, 16
    %v926 = vrot.slane %v924, 1
    %v927 = vshll.u32 %v775, 16
    %v929 = vrot.slane %v927, 2
    %v930 = vor.u32 %v926, %v929
    %v931 = vsel %vm896, %v921, %v930
    %v933 = vshrl.u32 %v895, 16
    %v935 = vrot.slane %v933, 1
    %v936 = vshll.u32 %v895, 16
    %v938 = vrot.slane %v936, 2
    %v939 = vor.u32 %v935, %v938
    %v940 = vsel %vm896, %v930, %v939
    %v961 = vunpack.c.l.b16 %v877
    %v962 = vunpack.c.l.b16 %v878
    %v963 = vunpack.c.l.b16 %v879
    %v964 = vunpack.c.l.b16 %v880
    %v965 = vunpack.c.l.b16 %v881
    %v966 = vunpack.c.l.b16 %v882
    %v967 = vunpack.c.l.b16 %v883
    %v968 = vunpack.c.l.b16 %v884
    %v969 = vunpack.c.l.b16 %v885
    %v970 = vunpack.c.l.b16 %v886
    %v971 = vunpack.c.l.b16 %v887
    %v972 = vunpack.c.l.b16 %v888
    %v973 = vunpack.c.l.b16 %v889
    %v974 = vunpack.c.l.b16 %v890
    %v975 = vunpack.c.l.b16 %v891
    %v976 = vunpack.c.l.b16 %v892
    %v977 = vpack.c.b16 %v962, %v961
    %v978 = vpack.c.b16 %v964, %v963
    %v979 = vpack.c.b16 %v966, %v965
    %v980 = vpack.c.b16 %v968, %v967
    %v981 = vpack.c.b16 %v970, %v969
    %v982 = vpack.c.b16 %v972, %v971
    %v983 = vpack.c.b16 %v974, %v973
    %v984 = vpack.c.b16 %v976, %v975
    %993 = vmatpush.bf16.msra.mxu0 %v984
    %994 = vmatpush.bf16.msra.mxu0 %v983
    %995 = vmatpush.bf16.msra.mxu0 %v982
    %996 = vmatpush.bf16.msra.mxu0 %v981
    %997 = vmatpush.bf16.msra.mxu0 %v980
    %998 = vmatpush.bf16.msra.mxu0 %v979
    %999 = vmatpush.bf16.msra.mxu0 %v978
    %1000 = vmatpush.bf16.msra.mxu0 %v977
    %1001 = vmatmul.bf16.gmra.mxu0 %v913
    %v1002 = vpop.f32.mrf.mxu0
    %v1003 = vadd.f32 0.0, %v1002
    %v1004 = vpop.f32.mrf.mxu0
    %v1005 = vadd.f32 0.0, %v1004
    %1006 = vmatmul.bf16.gmra.mxu0 %v922
    %v1007 = vpop.f32.mrf.mxu0
    %v1008 = vadd.f32 0.0, %v1007
    %v1009 = vpop.f32.mrf.mxu0
    %v1010 = vadd.f32 0.0, %v1009
    %1011 = vmatmul.bf16.gmra.mxu0 %v931
    %v1012 = vpop.f32.mrf.mxu0
    %v1013 = vadd.f32 0.0, %v1012
    %v1014 = vpop.f32.mrf.mxu0
    %v1015 = vadd.f32 0.0, %v1014
    %1016 = vmatmul.bf16.gmra.mxu0 %v940
    %v1017 = vpop.f32.mrf.mxu0
    %v1018 = vadd.f32 0.0, %v1017
    %v1019 = vpop.f32.mrf.mxu0
    %v1020 = vadd.f32 0.0, %v1019
    %1021 = vdwg.mxu0
    %v1022 = vadd.f32 %v867, %v1003
    %v1023 = vadd.f32 %v868, %v1005
    %v1024 = vadd.f32 %v869, %v1008
    %v1025 = vadd.f32 %v870, %v1010
    %v1026 = vadd.f32 %v871, %v1013
    %v1027 = vadd.f32 %v872, %v1015
    %v1028 = vadd.f32 %v873, %v1018
    %v1029 = vadd.f32 %v874, %v1020
    %v1030 = vld [vmem:[#allocation2 + $0x4] sm:$0xc]
    %s1031 = scalar_lea.vmem [#allocation4], 320
    %v1032 = vld [vmem:[%s1031] sm:$0xf]
    %v1033 = vld [vmem:[%s1031 + $0x4] sm:$0xf]
    %v1034 = vld [vmem:[%s1031 + $0x8] sm:$0xf]
    %v1035 = vld [vmem:[%s1031 + $0xc] sm:$0xf]
    %v1036 = vld [vmem:[%s1031 + $0x10] sm:$0xf]
    %v1037 = vld [vmem:[%s1031 + $0x14] sm:$0xf]
    %v1038 = vld [vmem:[%s1031 + $0x18] sm:$0xf]
    %v1039 = vld [vmem:[%s1031 + $0x1c] sm:$0xf]
    %v1040 = vld [vmem:[%s1031 + $0x20] sm:$0xf]
    %v1041 = vld [vmem:[%s1031 + $0x24] sm:$0xf]
    %v1042 = vld [vmem:[%s1031 + $0x28] sm:$0xf]
    %v1043 = vld [vmem:[%s1031 + $0x2c] sm:$0xf]
    %v1044 = vld [vmem:[%s1031 + $0x30] sm:$0xf]
    %v1045 = vld [vmem:[%s1031 + $0x34] sm:$0xf]
    %v1046 = vld [vmem:[%s1031 + $0x38] sm:$0xf]
    %v1047 = vld [vmem:[%s1031 + $0x3c] sm:$0xf]
    %v1049 = vunpack.c.l.b16 %v1030
    %v1050 = vpack.c.b16 %v764, %v1049
    %vm1051 = vcmask 1045504
    %v1052 = vrot.slane %v1050, 2
    %v1053 = vrot.slane %v773, 2
    %v1054 = vsel %vm1051, %v1052, %v1053
    %v1055 = vrot.slane %v774, 2
    %v1056 = vsel %vm1051, %v1053, %v1055
    %v1057 = vrot.slane %v775, 2
    %v1058 = vsel %vm1051, %v1055, %v1057
    %v1059 = vrot.slane %v895, 2
    %v1060 = vsel %vm1051, %v1057, %v1059
    %v1081 = vunpack.c.l.b16 %v1032
    %v1082 = vunpack.c.l.b16 %v1033
    %v1083 = vunpack.c.l.b16 %v1034
    %v1084 = vunpack.c.l.b16 %v1035
    %v1085 = vunpack.c.l.b16 %v1036
    %v1086 = vunpack.c.l.b16 %v1037
    %v1087 = vunpack.c.l.b16 %v1038
    %v1088 = vunpack.c.l.b16 %v1039
    %v1089 = vunpack.c.l.b16 %v1040
    %v1090 = vunpack.c.l.b16 %v1041
    %v1091 = vunpack.c.l.b16 %v1042
    %v1092 = vunpack.c.l.b16 %v1043
    %v1093 = vunpack.c.l.b16 %v1044
    %v1094 = vunpack.c.l.b16 %v1045
    %v1095 = vunpack.c.l.b16 %v1046
    %v1096 = vunpack.c.l.b16 %v1047
    %v1097 = vpack.c.b16 %v1082, %v1081
    %v1098 = vpack.c.b16 %v1084, %v1083
    %v1099 = vpack.c.b16 %v1086, %v1085
    %v1100 = vpack.c.b16 %v1088, %v1087
    %v1101 = vpack.c.b16 %v1090, %v1089
    %v1102 = vpack.c.b16 %v1092, %v1091
    %v1103 = vpack.c.b16 %v1094, %v1093
    %v1104 = vpack.c.b16 %v1096, %v1095
    %1113 = vmatpush.bf16.msra.mxu0 %v1104
    %1114 = vmatpush.bf16.msra.mxu0 %v1103
    %1115 = vmatpush.bf16.msra.mxu0 %v1102
    %1116 = vmatpush.bf16.msra.mxu0 %v1101
    %1117 = vmatpush.bf16.msra.mxu0 %v1100
    %1118 = vmatpush.bf16.msra.mxu0 %v1099
    %1119 = vmatpush.bf16.msra.mxu0 %v1098
    %1120 = vmatpush.bf16.msra.mxu0 %v1097
    %1121 = vmatmul.bf16.gmra.mxu0 %v1054
    %v1122 = vpop.f32.mrf.mxu0
    %v1123 = vadd.f32 0.0, %v1122
    %v1124 = vpop.f32.mrf.mxu0
    %v1125 = vadd.f32 0.0, %v1124
    %1126 = vmatmul.bf16.gmra.mxu0 %v1056
    %v1127 = vpop.f32.mrf.mxu0
    %v1128 = vadd.f32 0.0, %v1127
    %v1129 = vpop.f32.mrf.mxu0
    %v1130 = vadd.f32 0.0, %v1129
    %1131 = vmatmul.bf16.gmra.mxu0 %v1058
    %v1132 = vpop.f32.mrf.mxu0
    %v1133 = vadd.f32 0.0, %v1132
    %v1134 = vpop.f32.mrf.mxu0
    %v1135 = vadd.f32 0.0, %v1134
    %1136 = vmatmul.bf16.gmra.mxu0 %v1060
    %v1137 = vpop.f32.mrf.mxu0
    %v1138 = vadd.f32 0.0, %v1137
    %v1139 = vpop.f32.mrf.mxu0
    %v1140 = vadd.f32 0.0, %v1139
    %1141 = vdwg.mxu0
    %v1142 = vadd.f32 %v1022, %v1123
    %v1143 = vadd.f32 %v1023, %v1125
    %v1144 = vadd.f32 %v1024, %v1128
    %v1145 = vadd.f32 %v1025, %v1130
    %v1146 = vadd.f32 %v1026, %v1133
    %v1147 = vadd.f32 %v1027, %v1135
    %v1148 = vadd.f32 %v1028, %v1138
    %v1149 = vadd.f32 %v1029, %v1140
    %v1150 = vld [vmem:[#allocation2 + $0x8] sm:$0xc]
    %v1151 = vld [vmem:[#allocation2 + $0xc] sm:$0xf]
    %v1152 = vld [vmem:[#allocation2 + $0x10] sm:$0xf]
    %v1153 = vld [vmem:[#allocation2 + $0x14] sm:$0xf]
    %v1154 = vld [vmem:[#allocation2 + $0x18] sm:$0xf]
    %v1155 = vld [vmem:[#allocation2 + $0x1c] sm:$0xf]
    %v1156 = vld [vmem:[#allocation2 + $0x20] sm:$0xf]
    %v1157 = vld [vmem:[#allocation2 + $0x24] sm:$0xf]
    %v1158 = vld [vmem:[#allocation2 + $0x28] sm:$0x3]
    %s1159 = scalar_lea.vmem [#allocation4], 384
    %v1160 = vld [vmem:[%s1159] sm:$0xf]
    %v1161 = vld [vmem:[%s1159 + $0x4] sm:$0xf]
    %v1162 = vld [vmem:[%s1159 + $0x8] sm:$0xf]
    %v1163 = vld [vmem:[%s1159 + $0xc] sm:$0xf]
    %v1164 = vld [vmem:[%s1159 + $0x10] sm:$0xf]
    %v1165 = vld [vmem:[%s1159 + $0x14] sm:$0xf]
    %v1166 = vld [vmem:[%s1159 + $0x18] sm:$0xf]
    %v1167 = vld [vmem:[%s1159 + $0x1c] sm:$0xf]
    %v1168 = vld [vmem:[%s1159 + $0x20] sm:$0xf]
    %v1169 = vld [vmem:[%s1159 + $0x24] sm:$0xf]
    %v1170 = vld [vmem:[%s1159 + $0x28] sm:$0xf]
    %v1171 = vld [vmem:[%s1159 + $0x2c] sm:$0xf]
    %v1172 = vld [vmem:[%s1159 + $0x30] sm:$0xf]
    %v1173 = vld [vmem:[%s1159 + $0x34] sm:$0xf]
    %v1174 = vld [vmem:[%s1159 + $0x38] sm:$0xf]
    %v1175 = vld [vmem:[%s1159 + $0x3c] sm:$0xf]
    %v1185 = vunpack.c.l.b16 %v1150
    %v1186 = vunpack.c.l.b16 %v1151
    %v1187 = vunpack.c.l.b16 %v1152
    %v1188 = vunpack.c.l.b16 %v1153
    %v1189 = vunpack.c.l.b16 %v1154
    %v1190 = vunpack.c.l.b16 %v1155
    %v1191 = vunpack.c.l.b16 %v1156
    %v1192 = vunpack.c.l.b16 %v1157
    %v1193 = vunpack.c.l.b16 %v1158
    %v1194 = vpack.c.b16 %v1186, %v1185
    %v1195 = vpack.c.b16 %v1188, %v1187
    %v1196 = vpack.c.b16 %v1190, %v1189
    %v1197 = vpack.c.b16 %v1192, %v1191
    %v1198 = vpack.c.b16 %v1193, %v1193
    %v1199 = vrot.slane %v1194, 2
    %v1200 = vrot.slane %v1195, 2
    %v1201 = vsel %vm1051, %v1199, %v1200
    %v1202 = vrot.slane %v1196, 2
    %v1203 = vsel %vm1051, %v1200, %v1202
    %v1204 = vrot.slane %v1197, 2
    %v1205 = vsel %vm1051, %v1202, %v1204
    %v1206 = vrot.slane %v1198, 2
    %v1207 = vsel %vm1051, %v1204, %v1206
    %v1228 = vunpack.c.l.b16 %v1160
    %v1229 = vunpack.c.l.b16 %v1161
    %v1230 = vunpack.c.l.b16 %v1162
    %v1231 = vunpack.c.l.b16 %v1163
    %v1232 = vunpack.c.l.b16 %v1164
    %v1233 = vunpack.c.l.b16 %v1165
    %v1234 = vunpack.c.l.b16 %v1166
    %v1235 = vunpack.c.l.b16 %v1167
    %v1236 = vunpack.c.l.b16 %v1168
    %v1237 = vunpack.c.l.b16 %v1169
    %v1238 = vunpack.c.l.b16 %v1170
    %v1239 = vunpack.c.l.b16 %v1171
    %v1240 = vunpack.c.l.b16 %v1172
    %v1241 = vunpack.c.l.b16 %v1173
    %v1242 = vunpack.c.l.b16 %v1174
    %v1243 = vunpack.c.l.b16 %v1175
    %v1244 = vpack.c.b16 %v1229, %v1228
    %v1245 = vpack.c.b16 %v1231, %v1230
    %v1246 = vpack.c.b16 %v1233, %v1232
    %v1247 = vpack.c.b16 %v1235, %v1234
    %v1248 = vpack.c.b16 %v1237, %v1236
    %v1249 = vpack.c.b16 %v1239, %v1238
    %v1250 = vpack.c.b16 %v1241, %v1240
    %v1251 = vpack.c.b16 %v1243, %v1242
    %1260 = vmatpush.bf16.msra.mxu0 %v1251
    %1261 = vmatpush.bf16.msra.mxu0 %v1250
    %1262 = vmatpush.bf16.msra.mxu0 %v1249
    %1263 = vmatpush.bf16.msra.mxu0 %v1248
    %1264 = vmatpush.bf16.msra.mxu0 %v1247
    %1265 = vmatpush.bf16.msra.mxu0 %v1246
    %1266 = vmatpush.bf16.msra.mxu0 %v1245
    %1267 = vmatpush.bf16.msra.mxu0 %v1244
    %1268 = vmatmul.bf16.gmra.mxu0 %v1201
    %v1269 = vpop.f32.mrf.mxu0
    %v1270 = vadd.f32 0.0, %v1269
    %v1271 = vpop.f32.mrf.mxu0
    %v1272 = vadd.f32 0.0, %v1271
    %1273 = vmatmul.bf16.gmra.mxu0 %v1203
    %v1274 = vpop.f32.mrf.mxu0
    %v1275 = vadd.f32 0.0, %v1274
    %v1276 = vpop.f32.mrf.mxu0
    %v1277 = vadd.f32 0.0, %v1276
    %1278 = vmatmul.bf16.gmra.mxu0 %v1205
    %v1279 = vpop.f32.mrf.mxu0
    %v1280 = vadd.f32 0.0, %v1279
    %v1281 = vpop.f32.mrf.mxu0
    %v1282 = vadd.f32 0.0, %v1281
    %1283 = vmatmul.bf16.gmra.mxu0 %v1207
    %v1284 = vpop.f32.mrf.mxu0
    %v1285 = vadd.f32 0.0, %v1284
    %v1286 = vpop.f32.mrf.mxu0
    %v1287 = vadd.f32 0.0, %v1286
    %1288 = vdwg.mxu0
    %v1289 = vadd.f32 %v1142, %v1270
    %v1290 = vadd.f32 %v1143, %v1272
    %v1291 = vadd.f32 %v1144, %v1275
    %v1292 = vadd.f32 %v1145, %v1277
    %v1293 = vadd.f32 %v1146, %v1280
    %v1294 = vadd.f32 %v1147, %v1282
    %v1295 = vadd.f32 %v1148, %v1285
    %v1296 = vadd.f32 %v1149, %v1287
    %v1297 = vld [vmem:[#allocation2 + $0x28] sm:$0x7]
    %s1298 = scalar_lea.vmem [#allocation4], 448
    %v1299 = vld [vmem:[%s1298] sm:$0xf]
    %v1300 = vld [vmem:[%s1298 + $0x4] sm:$0xf]
    %v1301 = vld [vmem:[%s1298 + $0x8] sm:$0xf]
    %v1302 = vld [vmem:[%s1298 + $0xc] sm:$0xf]
    %v1303 = vld [vmem:[%s1298 + $0x10] sm:$0xf]
    %v1304 = vld [vmem:[%s1298 + $0x14] sm:$0xf]
    %v1305 = vld [vmem:[%s1298 + $0x18] sm:$0xf]
    %v1306 = vld [vmem:[%s1298 + $0x1c] sm:$0xf]
    %v1307 = vld [vmem:[%s1298 + $0x20] sm:$0xf]
    %v1308 = vld [vmem:[%s1298 + $0x24] sm:$0xf]
    %v1309 = vld [vmem:[%s1298 + $0x28] sm:$0xf]
    %v1310 = vld [vmem:[%s1298 + $0x2c] sm:$0xf]
    %v1311 = vld [vmem:[%s1298 + $0x30] sm:$0xf]
    %v1312 = vld [vmem:[%s1298 + $0x34] sm:$0xf]
    %v1313 = vld [vmem:[%s1298 + $0x38] sm:$0xf]
    %v1314 = vld [vmem:[%s1298 + $0x3c] sm:$0xf]
    %v1316 = vunpack.c.l.b16 %v1297
    %v1317 = vpack.c.b16 %v1316, %v1316
    %vm1318 = vsmask.f32 5376
    %v1320 = vshrl.u32 %v1194, 16
    %v1322 = vrot.slane %v1320, 2
    %v1323 = vshll.u32 %v1194, 16
    %v1325 = vrot.slane %v1323, 3
    %v1326 = vor.u32 %v1322, %v1325
    %v1328 = vshrl.u32 %v1195, 16
    %v1330 = vrot.slane %v1328, 2
    %v1331 = vshll.u32 %v1195, 16
    %v1333 = vrot.slane %v1331, 3
    %v1334 = vor.u32 %v1330, %v1333
    %v1335 = vsel %vm1318, %v1326, %v1334
    %v1337 = vshrl.u32 %v1196, 16
    %v1339 = vrot.slane %v1337, 2
    %v1340 = vshll.u32 %v1196, 16
    %v1342 = vrot.slane %v1340, 3
    %v1343 = vor.u32 %v1339, %v1342
    %v1344 = vsel %vm1318, %v1334, %v1343
    %v1346 = vshrl.u32 %v1197, 16
    %v1348 = vrot.slane %v1346, 2
    %v1349 = vshll.u32 %v1197, 16
    %v1351 = vrot.slane %v1349, 3
    %v1352 = vor.u32 %v1348, %v1351
    %v1353 = vsel %vm1318, %v1343, %v1352
    %v1355 = vshrl.u32 %v1317, 16
    %v1357 = vrot.slane %v1355, 2
    %v1358 = vshll.u32 %v1317, 16
    %v1360 = vrot.slane %v1358, 3
    %v1361 = vor.u32 %v1357, %v1360
    %v1362 = vsel %vm1318, %v1352, %v1361
    %v1383 = vunpack.c.l.b16 %v1299
    %v1384 = vunpack.c.l.b16 %v1300
    %v1385 = vunpack.c.l.b16 %v1301
    %v1386 = vunpack.c.l.b16 %v1302
    %v1387 = vunpack.c.l.b16 %v1303
    %v1388 = vunpack.c.l.b16 %v1304
    %v1389 = vunpack.c.l.b16 %v1305
    %v1390 = vunpack.c.l.b16 %v1306
    %v1391 = vunpack.c.l.b16 %v1307
    %v1392 = vunpack.c.l.b16 %v1308
    %v1393 = vunpack.c.l.b16 %v1309
    %v1394 = vunpack.c.l.b16 %v1310
    %v1395 = vunpack.c.l.b16 %v1311
    %v1396 = vunpack.c.l.b16 %v1312
    %v1397 = vunpack.c.l.b16 %v1313
    %v1398 = vunpack.c.l.b16 %v1314
    %v1399 = vpack.c.b16 %v1384, %v1383
    %v1400 = vpack.c.b16 %v1386, %v1385
    %v1401 = vpack.c.b16 %v1388, %v1387
    %v1402 = vpack.c.b16 %v1390, %v1389
    %v1403 = vpack.c.b16 %v1392, %v1391
    %v1404 = vpack.c.b16 %v1394, %v1393
    %v1405 = vpack.c.b16 %v1396, %v1395
    %v1406 = vpack.c.b16 %v1398, %v1397
    %1415 = vmatpush.bf16.msra.mxu0 %v1406
    %1416 = vmatpush.bf16.msra.mxu0 %v1405
    %1417 = vmatpush.bf16.msra.mxu0 %v1404
    %1418 = vmatpush.bf16.msra.mxu0 %v1403
    %1419 = vmatpush.bf16.msra.mxu0 %v1402
    %1420 = vmatpush.bf16.msra.mxu0 %v1401
    %1421 = vmatpush.bf16.msra.mxu0 %v1400
    %1422 = vmatpush.bf16.msra.mxu0 %v1399
    %1423 = vmatmul.bf16.gmra.mxu0 %v1335
    %v1424 = vpop.f32.mrf.mxu0
    %v1425 = vadd.f32 0.0, %v1424
    %v1426 = vpop.f32.mrf.mxu0
    %v1427 = vadd.f32 0.0, %v1426
    %1428 = vmatmul.bf16.gmra.mxu0 %v1344
    %v1429 = vpop.f32.mrf.mxu0
    %v1430 = vadd.f32 0.0, %v1429
    %v1431 = vpop.f32.mrf.mxu0
    %v1432 = vadd.f32 0.0, %v1431
    %1433 = vmatmul.bf16.gmra.mxu0 %v1353
    %v1434 = vpop.f32.mrf.mxu0
    %v1435 = vadd.f32 0.0, %v1434
    %v1436 = vpop.f32.mrf.mxu0
    %v1437 = vadd.f32 0.0, %v1436
    %1438 = vmatmul.bf16.gmra.mxu0 %v1362
    %v1439 = vpop.f32.mrf.mxu0
    %v1440 = vadd.f32 0.0, %v1439
    %v1441 = vpop.f32.mrf.mxu0
    %v1442 = vadd.f32 0.0, %v1441
    %1443 = vdwg.mxu0
    %v1444 = vadd.f32 %v1289, %v1425
    %v1445 = vadd.f32 %v1290, %v1427
    %v1446 = vadd.f32 %v1291, %v1430
    %v1447 = vadd.f32 %v1292, %v1432
    %v1448 = vadd.f32 %v1293, %v1435
    %v1449 = vadd.f32 %v1294, %v1437
    %v1450 = vadd.f32 %v1295, %v1440
    %v1451 = vadd.f32 %v1296, %v1442
    %v1452 = vld [vmem:[#allocation2 + $0x8] sm:$0x8]
    %s1453 = scalar_lea.vmem [#allocation4], 512
    %v1454 = vld [vmem:[%s1453] sm:$0xf]
    %v1455 = vld [vmem:[%s1453 + $0x4] sm:$0xf]
    %v1456 = vld [vmem:[%s1453 + $0x8] sm:$0xf]
    %v1457 = vld [vmem:[%s1453 + $0xc] sm:$0xf]
    %v1458 = vld [vmem:[%s1453 + $0x10] sm:$0xf]
    %v1459 = vld [vmem:[%s1453 + $0x14] sm:$0xf]
    %v1460 = vld [vmem:[%s1453 + $0x18] sm:$0xf]
    %v1461 = vld [vmem:[%s1453 + $0x1c] sm:$0xf]
    %v1462 = vld [vmem:[%s1453 + $0x20] sm:$0xf]
    %v1463 = vld [vmem:[%s1453 + $0x24] sm:$0xf]
    %v1464 = vld [vmem:[%s1453 + $0x28] sm:$0xf]
    %v1465 = vld [vmem:[%s1453 + $0x2c] sm:$0xf]
    %v1466 = vld [vmem:[%s1453 + $0x30] sm:$0xf]
    %v1467 = vld [vmem:[%s1453 + $0x34] sm:$0xf]
    %v1468 = vld [vmem:[%s1453 + $0x38] sm:$0xf]
    %v1469 = vld [vmem:[%s1453 + $0x3c] sm:$0xf]
    %v1471 = vunpack.c.l.b16 %v1452
    %v1472 = vpack.c.b16 %v1186, %v1471
    %vm1473 = vcmask 1044480
    %v1474 = vrot.slane %v1472, 3
    %v1475 = vrot.slane %v1195, 3
    %v1476 = vsel %vm1473, %v1474, %v1475
    %v1477 = vrot.slane %v1196, 3
    %v1478 = vsel %vm1473, %v1475, %v1477
    %v1479 = vrot.slane %v1197, 3
    %v1480 = vsel %vm1473, %v1477, %v1479
    %v1481 = vrot.slane %v1317, 3
    %v1482 = vsel %vm1473, %v1479, %v1481
    %v1503 = vunpack.c.l.b16 %v1454
    %v1504 = vunpack.c.l.b16 %v1455
    %v1505 = vunpack.c.l.b16 %v1456
    %v1506 = vunpack.c.l.b16 %v1457
    %v1507 = vunpack.c.l.b16 %v1458
    %v1508 = vunpack.c.l.b16 %v1459
    %v1509 = vunpack.c.l.b16 %v1460
    %v1510 = vunpack.c.l.b16 %v1461
    %v1511 = vunpack.c.l.b16 %v1462
    %v1512 = vunpack.c.l.b16 %v1463
    %v1513 = vunpack.c.l.b16 %v1464
    %v1514 = vunpack.c.l.b16 %v1465
    %v1515 = vunpack.c.l.b16 %v1466
    %v1516 = vunpack.c.l.b16 %v1467
    %v1517 = vunpack.c.l.b16 %v1468
    %v1518 = vunpack.c.l.b16 %v1469
    %v1519 = vpack.c.b16 %v1504, %v1503
    %v1520 = vpack.c.b16 %v1506, %v1505
    %v1521 = vpack.c.b16 %v1508, %v1507
    %v1522 = vpack.c.b16 %v1510, %v1509
    %v1523 = vpack.c.b16 %v1512, %v1511
    %v1524 = vpack.c.b16 %v1514, %v1513
    %v1525 = vpack.c.b16 %v1516, %v1515
    %v1526 = vpack.c.b16 %v1518, %v1517
    %1535 = vmatpush.bf16.msra.mxu0 %v1526
    %1536 = vmatpush.bf16.msra.mxu0 %v1525
    %1537 = vmatpush.bf16.msra.mxu0 %v1524
    %1538 = vmatpush.bf16.msra.mxu0 %v1523
    %1539 = vmatpush.bf16.msra.mxu0 %v1522
    %1540 = vmatpush.bf16.msra.mxu0 %v1521
    %1541 = vmatpush.bf16.msra.mxu0 %v1520
    %1542 = vmatpush.bf16.msra.mxu0 %v1519
    %1543 = vmatmul.bf16.gmra.mxu0 %v1476
    %v1544 = vpop.f32.mrf.mxu0
    %v1545 = vadd.f32 0.0, %v1544
    %v1546 = vpop.f32.mrf.mxu0
    %v1547 = vadd.f32 0.0, %v1546
    %1548 = vmatmul.bf16.gmra.mxu0 %v1478
    %v1549 = vpop.f32.mrf.mxu0
    %v1550 = vadd.f32 0.0, %v1549
    %v1551 = vpop.f32.mrf.mxu0
    %v1552 = vadd.f32 0.0, %v1551
    %1553 = vmatmul.bf16.gmra.mxu0 %v1480
    %v1554 = vpop.f32.mrf.mxu0
    %v1555 = vadd.f32 0.0, %v1554
    %v1556 = vpop.f32.mrf.mxu0
    %v1557 = vadd.f32 0.0, %v1556
    %1558 = vmatmul.bf16.gmra.mxu0 %v1482
    %v1559 = vpop.f32.mrf.mxu0
    %v1560 = vadd.f32 0.0, %v1559
    %v1561 = vpop.f32.mrf.mxu0
    %v1562 = vadd.f32 0.0, %v1561
    %1563 = vdwg.mxu0
    %v1564 = vadd.f32 %v1444, %v1545
    %v1565 = vadd.f32 %v1445, %v1547
    %v1566 = vadd.f32 %v1446, %v1550
    %v1567 = vadd.f32 %v1447, %v1552
    %v1568 = vadd.f32 %v1448, %v1555
    %v1569 = vadd.f32 %v1449, %v1557
    %v1570 = vadd.f32 %v1450, %v1560
    %v1571 = vadd.f32 %v1451, %v1562
    %v1572 = vld [vmem:[%s5] sm:$0x1]
    %v1574 = vperm.slane %v1572, 0
    %v1576 = vadd.f32 %v1564, %v1574
    %v1577 = vadd.f32 %v1565, %v1574
    %v1578 = vadd.f32 %v1566, %v1574
    %v1579 = vadd.f32 %v1567, %v1574
    %v1580 = vadd.f32 %v1568, %v1574
    %v1581 = vadd.f32 %v1569, %v1574
    %v1582 = vadd.f32 %v1570, %v1574
    %v1583 = vadd.f32 %v1571, %v1574
    %v1584 = vmul.f32 %v1576, %v213
    %v1585 = vmul.f32 %v1577, %v214
    %v1586 = vmul.f32 %v1578, %v215
    %v1587 = vmul.f32 %v1579, %v216
    %v1588 = vmul.f32 %v1580, %v217
    %v1589 = vmul.f32 %v1581, %v218
    %v1590 = vmul.f32 %v1582, %v219
    %v1591 = vmul.f32 %v1583, %v220
    %v1592 = vpack.c.bf16 %v1584, %v1584
    %v1593 = vpack.c.bf16 %v1585, %v1585
    %v1594 = vpack.c.bf16 %v1586, %v1586
    %v1595 = vpack.c.bf16 %v1587, %v1587
    %v1596 = vpack.c.bf16 %v1588, %v1588
    %v1597 = vpack.c.bf16 %v1589, %v1589
    %v1598 = vpack.c.bf16 %v1590, %v1590
    %v1599 = vpack.c.bf16 %v1591, %v1591
    %vm1608 = vcmask 1042432
    %vm1609 = vcmask 1046532
    %vm1610 = vmor %vm1608, %vm1609
    %v1611 = vrot.slane %v1592, 5
    %v1612 = vrot.slane %v1611, 4
    %v1613 = vrot.slane %v1593, 5
    %v1614 = vsel %vm1610, %v1612, %v1613
    %v1615 = vrot.slane %v1613, 4
    %v1616 = vrot.slane %v1594, 5
    %v1617 = vsel %vm1610, %v1615, %v1616
    %v1618 = vrot.slane %v1616, 4
    %v1619 = vrot.slane %v1595, 5
    %v1620 = vsel %vm1610, %v1618, %v1619
    %v1621 = vrot.slane %v1619, 4
    %v1622 = vrot.slane %v1596, 5
    %v1623 = vsel %vm1610, %v1621, %v1622
    %v1624 = vrot.slane %v1622, 4
    %v1625 = vrot.slane %v1597, 5
    %v1626 = vsel %vm1610, %v1624, %v1625
    %v1627 = vrot.slane %v1625, 4
    %v1628 = vrot.slane %v1598, 5
    %v1629 = vsel %vm1610, %v1627, %v1628
    %v1630 = vrot.slane %v1628, 4
    %v1631 = vrot.slane %v1599, 5
    %v1632 = vsel %vm1610, %v1630, %v1631
    %v1633 = vrot.slane %v1631, 4
    %1643 = vst [vmem:[#allocation3 + $0x8] sm:$0x8] %v1611
    %1644 = vst [vmem:[#allocation3 + $0xc] sm:$0xf] %v1614
    %1645 = vst [vmem:[#allocation3 + $0x10] sm:$0xf] %v1617
    %1646 = vst [vmem:[#allocation3 + $0x14] sm:$0xf] %v1620
    %1647 = vst [vmem:[#allocation3 + $0x18] sm:$0xf] %v1623
    %1648 = vst [vmem:[#allocation3 + $0x1c] sm:$0xf] %v1626
    %1649 = vst [vmem:[#allocation3 + $0x20] sm:$0xf] %v1629
    %1650 = vst [vmem:[#allocation3 + $0x24] sm:$0xf] %v1632
    %1651 = vst [vmem:[#allocation3 + $0x28] sm:$0x1] %v1633
    %v1652 = vld [vmem:[#allocation3] sm:$0xf]
    %v1653 = vld [vmem:[#allocation3 + $0x4] sm:$0xf]
    %v1654 = vld [vmem:[#allocation3 + $0x8] sm:$0xf]
    %v1655 = vld [vmem:[#allocation3 + $0xc] sm:$0xf]
    %v1656 = vld [vmem:[#allocation3 + $0x10] sm:$0xf]
    %v1657 = vld [vmem:[#allocation3 + $0x14] sm:$0xf]
    %v1658 = vld [vmem:[#allocation3 + $0x18] sm:$0xf]
    %v1659 = vld [vmem:[#allocation3 + $0x1c] sm:$0xf]
    %v1660 = vld [vmem:[#allocation3 + $0x20] sm:$0xf]
    %v1661 = vld [vmem:[#allocation3 + $0x24] sm:$0xf]
    %v1662 = vld [vmem:[#allocation6] sm:$0xf]
    %v1663 = vld [vmem:[#allocation6 + $0x4] sm:$0xf]
    %v1664 = vld [vmem:[#allocation6 + $0x8] sm:$0xf]
    %v1665 = vld [vmem:[#allocation6 + $0xc] sm:$0xf]
    %v1666 = vld [vmem:[#allocation6 + $0x10] sm:$0xf]
    %v1667 = vld [vmem:[#allocation6 + $0x14] sm:$0xf]
    %v1668 = vld [vmem:[#allocation6 + $0x18] sm:$0xf]
    %v1669 = vld [vmem:[#allocation6 + $0x1c] sm:$0xf]
    %v1670 = vld [vmem:[#allocation6 + $0x20] sm:$0xf]
    %v1671 = vld [vmem:[#allocation6 + $0x24] sm:$0xf]
    %v1672 = vld [vmem:[#allocation6 + $0x28] sm:$0xf]
    %v1673 = vld [vmem:[#allocation6 + $0x2c] sm:$0xf]
    %v1674 = vld [vmem:[#allocation6 + $0x30] sm:$0xf]
    %v1675 = vld [vmem:[#allocation6 + $0x34] sm:$0xf]
    %v1676 = vld [vmem:[#allocation6 + $0x38] sm:$0xf]
    %v1677 = vld [vmem:[#allocation6 + $0x3c] sm:$0xf]
    %v1678 = vld [vmem:[#allocation3 + $0x28] sm:$0x1]
    %s1679 = scalar_lea.vmem [#allocation6], 64
    %v1680 = vld [vmem:[%s1679] sm:$0xf]
    %v1681 = vld [vmem:[%s1679 + $0x4] sm:$0xf]
    %v1682 = vld [vmem:[%s1679 + $0x8] sm:$0xf]
    %v1683 = vld [vmem:[%s1679 + $0xc] sm:$0xf]
    %v1684 = vld [vmem:[%s1679 + $0x10] sm:$0xf]
    %v1685 = vld [vmem:[%s1679 + $0x14] sm:$0xf]
    %v1686 = vld [vmem:[%s1679 + $0x18] sm:$0xf]
    %v1687 = vld [vmem:[%s1679 + $0x1c] sm:$0xf]
    %v1688 = vld [vmem:[%s1679 + $0x20] sm:$0xf]
    %v1689 = vld [vmem:[%s1679 + $0x24] sm:$0xf]
    %v1690 = vld [vmem:[%s1679 + $0x28] sm:$0xf]
    %v1691 = vld [vmem:[%s1679 + $0x2c] sm:$0xf]
    %v1692 = vld [vmem:[%s1679 + $0x30] sm:$0xf]
    %v1693 = vld [vmem:[%s1679 + $0x34] sm:$0xf]
    %v1694 = vld [vmem:[%s1679 + $0x38] sm:$0xf]
    %v1695 = vld [vmem:[%s1679 + $0x3c] sm:$0xf]
    %v1707 = vunpack.c.l.b16 %v1652
    %v1708 = vunpack.c.l.b16 %v1653
    %v1709 = vunpack.c.l.b16 %v1654
    %v1710 = vunpack.c.l.b16 %v1655
    %v1711 = vunpack.c.l.b16 %v1656
    %v1712 = vunpack.c.l.b16 %v1657
    %v1713 = vunpack.c.l.b16 %v1658
    %v1714 = vunpack.c.l.b16 %v1659
    %v1715 = vunpack.c.l.b16 %v1660
    %v1716 = vunpack.c.l.b16 %v1661
    %v1717 = vunpack.c.l.b16 %v1678
    %v1718 = vpack.c.b16 %v1708, %v1707
    %v1719 = vpack.c.b16 %v1710, %v1709
    %v1720 = vpack.c.b16 %v1712, %v1711
    %v1721 = vpack.c.b16 %v1714, %v1713
    %v1722 = vpack.c.b16 %v1716, %v1715
    %v1723 = vpack.c.b16 %v1717, %v1717
    %v1725 = vshrl.u32 %v1718, 16
    %v1727 = vshll.u32 %v1718, 16
    %v1729 = vrot.slane %v1727, 1
    %v1730 = vor.u32 %v1725, %v1729
    %v1732 = vshll.u32 %v1719, 16
    %v1734 = vrot.slane %v1732, 1
    %v1735 = vsel %vm409, %v1730, %v1734
    %v1736 = vshrl.u32 %v1719, 16
    %v1738 = vor.u32 %v1736, %v1734
    %v1740 = vshll.u32 %v1720, 16
    %v1742 = vrot.slane %v1740, 1
    %v1743 = vsel %vm409, %v1738, %v1742
    %v1744 = vshrl.u32 %v1720, 16
    %v1746 = vor.u32 %v1744, %v1742
    %v1748 = vshll.u32 %v1721, 16
    %v1750 = vrot.slane %v1748, 1
    %v1751 = vsel %vm409, %v1746, %v1750
    %v1752 = vshrl.u32 %v1721, 16
    %v1754 = vor.u32 %v1752, %v1750
    %v1756 = vshll.u32 %v1722, 16
    %v1758 = vrot.slane %v1756, 1
    %v1759 = vsel %vm409, %v1754, %v1758
    %v1760 = vshrl.u32 %v1722, 16
    %v1762 = vor.u32 %v1760, %v1758
    %v1764 = vshll.u32 %v1723, 16
    %v1766 = vrot.slane %v1764, 1
    %v1767 = vsel %vm409, %v1762, %v1766
    %v1789 = vunpack.c.l.b16 %v1680
    %v1790 = vunpack.c.l.b16 %v1681
    %v1791 = vunpack.c.l.b16 %v1682
    %v1792 = vunpack.c.l.b16 %v1683
    %v1793 = vunpack.c.l.b16 %v1684
    %v1794 = vunpack.c.l.b16 %v1685
    %v1795 = vunpack.c.l.b16 %v1686
    %v1796 = vunpack.c.l.b16 %v1687
    %v1797 = vunpack.c.l.b16 %v1688
    %v1798 = vunpack.c.l.b16 %v1689
    %v1799 = vunpack.c.l.b16 %v1690
    %v1800 = vunpack.c.l.b16 %v1691
    %v1801 = vunpack.c.l.b16 %v1692
    %v1802 = vunpack.c.l.b16 %v1693
    %v1803 = vunpack.c.l.b16 %v1694
    %v1804 = vunpack.c.l.b16 %v1695
    %v1805 = vpack.c.b16 %v1790, %v1789
    %v1806 = vpack.c.b16 %v1792, %v1791
    %v1807 = vpack.c.b16 %v1794, %v1793
    %v1808 = vpack.c.b16 %v1796, %v1795
    %v1809 = vpack.c.b16 %v1798, %v1797
    %v1810 = vpack.c.b16 %v1800, %v1799
    %v1811 = vpack.c.b16 %v1802, %v1801
    %v1812 = vpack.c.b16 %v1804, %v1803
    %1821 = vmatpush.bf16.msra.mxu0 %v1812
    %1822 = vmatpush.bf16.msra.mxu0 %v1811
    %1823 = vmatpush.bf16.msra.mxu0 %v1810
    %1824 = vmatpush.bf16.msra.mxu0 %v1809
    %1825 = vmatpush.bf16.msra.mxu0 %v1808
    %1826 = vmatpush.bf16.msra.mxu0 %v1807
    %1827 = vmatpush.bf16.msra.mxu0 %v1806
    %1828 = vmatpush.bf16.msra.mxu0 %v1805
    %1829 = vmatmul.bf16.gmra.mxu0 %v1735
    %v1830 = vpop.f32.mrf.mxu0
    %v1831 = vadd.f32 0.0, %v1830
    %v1832 = vpop.f32.mrf.mxu0
    %v1833 = vadd.f32 0.0, %v1832
    %1834 = vmatmul.bf16.gmra.mxu0 %v1743
    %v1835 = vpop.f32.mrf.mxu0
    %v1836 = vadd.f32 0.0, %v1835
    %v1837 = vpop.f32.mrf.mxu0
    %v1838 = vadd.f32 0.0, %v1837
    %1839 = vmatmul.bf16.gmra.mxu0 %v1751
    %v1840 = vpop.f32.mrf.mxu0
    %v1841 = vadd.f32 0.0, %v1840
    %v1842 = vpop.f32.mrf.mxu0
    %v1843 = vadd.f32 0.0, %v1842
    %1844 = vmatmul.bf16.gmra.mxu0 %v1759
    %v1845 = vpop.f32.mrf.mxu0
    %v1846 = vadd.f32 0.0, %v1845
    %v1847 = vpop.f32.mrf.mxu0
    %v1848 = vadd.f32 0.0, %v1847
    %1849 = vmatmul.bf16.gmra.mxu0 %v1767
    %v1850 = vpop.f32.mrf.mxu0
    %v1851 = vadd.f32 0.0, %v1850
    %v1852 = vpop.f32.mrf.mxu0
    %v1853 = vadd.f32 0.0, %v1852
    %1854 = vdwg.mxu0
    %v1876 = vunpack.c.l.b16 %v1662
    %v1877 = vunpack.c.l.b16 %v1663
    %v1878 = vunpack.c.l.b16 %v1664
    %v1879 = vunpack.c.l.b16 %v1665
    %v1880 = vunpack.c.l.b16 %v1666
    %v1881 = vunpack.c.l.b16 %v1667
    %v1882 = vunpack.c.l.b16 %v1668
    %v1883 = vunpack.c.l.b16 %v1669
    %v1884 = vunpack.c.l.b16 %v1670
    %v1885 = vunpack.c.l.b16 %v1671
    %v1886 = vunpack.c.l.b16 %v1672
    %v1887 = vunpack.c.l.b16 %v1673
    %v1888 = vunpack.c.l.b16 %v1674
    %v1889 = vunpack.c.l.b16 %v1675
    %v1890 = vunpack.c.l.b16 %v1676
    %v1891 = vunpack.c.l.b16 %v1677
    %v1892 = vpack.c.b16 %v1877, %v1876
    %v1893 = vpack.c.b16 %v1879, %v1878
    %v1894 = vpack.c.b16 %v1881, %v1880
    %v1895 = vpack.c.b16 %v1883, %v1882
    %v1896 = vpack.c.b16 %v1885, %v1884
    %v1897 = vpack.c.b16 %v1887, %v1886
    %v1898 = vpack.c.b16 %v1889, %v1888
    %v1899 = vpack.c.b16 %v1891, %v1890
    %1908 = vmatpush.bf16.msra.mxu0 %v1899
    %1909 = vmatpush.bf16.msra.mxu0 %v1898
    %1910 = vmatpush.bf16.msra.mxu0 %v1897
    %1911 = vmatpush.bf16.msra.mxu0 %v1896
    %1912 = vmatpush.bf16.msra.mxu0 %v1895
    %1913 = vmatpush.bf16.msra.mxu0 %v1894
    %1914 = vmatpush.bf16.msra.mxu0 %v1893
    %1915 = vmatpush.bf16.msra.mxu0 %v1892
    %1916 = vmatmul.bf16.gmra.mxu0 %v1718
    %v1917 = vpop.f32.mrf.mxu0
    %v1918 = vadd.f32 %v1831, %v1917
    %v1919 = vpop.f32.mrf.mxu0
    %v1920 = vadd.f32 %v1833, %v1919
    %1921 = vmatmul.bf16.gmra.mxu0 %v1719
    %v1922 = vpop.f32.mrf.mxu0
    %v1923 = vadd.f32 %v1836, %v1922
    %v1924 = vpop.f32.mrf.mxu0
    %v1925 = vadd.f32 %v1838, %v1924
    %1926 = vmatmul.bf16.gmra.mxu0 %v1720
    %v1927 = vpop.f32.mrf.mxu0
    %v1928 = vadd.f32 %v1841, %v1927
    %v1929 = vpop.f32.mrf.mxu0
    %v1930 = vadd.f32 %v1843, %v1929
    %1931 = vmatmul.bf16.gmra.mxu0 %v1721
    %v1932 = vpop.f32.mrf.mxu0
    %v1933 = vadd.f32 %v1846, %v1932
    %v1934 = vpop.f32.mrf.mxu0
    %v1935 = vadd.f32 %v1848, %v1934
    %1936 = vmatmul.bf16.gmra.mxu0 %v1722
    %v1937 = vpop.f32.mrf.mxu0
    %v1938 = vadd.f32 %v1851, %v1937
    %v1939 = vpop.f32.mrf.mxu0
    %v1940 = vadd.f32 %v1853, %v1939
    %1941 = vdwg.mxu0
    %v1942 = vld [vmem:[#allocation3] sm:$0xe]
    %s1943 = scalar_lea.vmem [#allocation6], 128
    %v1944 = vld [vmem:[%s1943] sm:$0xf]
    %v1945 = vld [vmem:[%s1943 + $0x4] sm:$0xf]
    %v1946 = vld [vmem:[%s1943 + $0x8] sm:$0xf]
    %v1947 = vld [vmem:[%s1943 + $0xc] sm:$0xf]
    %v1948 = vld [vmem:[%s1943 + $0x10] sm:$0xf]
    %v1949 = vld [vmem:[%s1943 + $0x14] sm:$0xf]
    %v1950 = vld [vmem:[%s1943 + $0x18] sm:$0xf]
    %v1951 = vld [vmem:[%s1943 + $0x1c] sm:$0xf]
    %v1952 = vld [vmem:[%s1943 + $0x20] sm:$0xf]
    %v1953 = vld [vmem:[%s1943 + $0x24] sm:$0xf]
    %v1954 = vld [vmem:[%s1943 + $0x28] sm:$0xf]
    %v1955 = vld [vmem:[%s1943 + $0x2c] sm:$0xf]
    %v1956 = vld [vmem:[%s1943 + $0x30] sm:$0xf]
    %v1957 = vld [vmem:[%s1943 + $0x34] sm:$0xf]
    %v1958 = vld [vmem:[%s1943 + $0x38] sm:$0xf]
    %v1959 = vld [vmem:[%s1943 + $0x3c] sm:$0xf]
    %v1961 = vunpack.c.l.b16 %v1942
    %v1962 = vpack.c.b16 %v1708, %v1961
    %v1963 = vrot.slane %v1962, 1
    %v1964 = vrot.slane %v1719, 1
    %v1965 = vsel %vm629, %v1963, %v1964
    %v1966 = vrot.slane %v1720, 1
    %v1967 = vsel %vm629, %v1964, %v1966
    %v1968 = vrot.slane %v1721, 1
    %v1969 = vsel %vm629, %v1966, %v1968
    %v1970 = vrot.slane %v1722, 1
    %v1971 = vsel %vm629, %v1968, %v1970
    %v1972 = vrot.slane %v1723, 1
    %v1973 = vsel %vm629, %v1970, %v1972
    %v1995 = vunpack.c.l.b16 %v1944
    %v1996 = vunpack.c.l.b16 %v1945
    %v1997 = vunpack.c.l.b16 %v1946
    %v1998 = vunpack.c.l.b16 %v1947
    %v1999 = vunpack.c.l.b16 %v1948
    %v2000 = vunpack.c.l.b16 %v1949
    %v2001 = vunpack.c.l.b16 %v1950
    %v2002 = vunpack.c.l.b16 %v1951
    %v2003 = vunpack.c.l.b16 %v1952
    %v2004 = vunpack.c.l.b16 %v1953
    %v2005 = vunpack.c.l.b16 %v1954
    %v2006 = vunpack.c.l.b16 %v1955
    %v2007 = vunpack.c.l.b16 %v1956
    %v2008 = vunpack.c.l.b16 %v1957
    %v2009 = vunpack.c.l.b16 %v1958
    %v2010 = vunpack.c.l.b16 %v1959
    %v2011 = vpack.c.b16 %v1996, %v1995
    %v2012 = vpack.c.b16 %v1998, %v1997
    %v2013 = vpack.c.b16 %v2000, %v1999
    %v2014 = vpack.c.b16 %v2002, %v2001
    %v2015 = vpack.c.b16 %v2004, %v2003
    %v2016 = vpack.c.b16 %v2006, %v2005
    %v2017 = vpack.c.b16 %v2008, %v2007
    %v2018 = vpack.c.b16 %v2010, %v2009
    %2027 = vmatpush.bf16.msra.mxu0 %v2018
    %2028 = vmatpush.bf16.msra.mxu0 %v2017
    %2029 = vmatpush.bf16.msra.mxu0 %v2016
    %2030 = vmatpush.bf16.msra.mxu0 %v2015
    %2031 = vmatpush.bf16.msra.mxu0 %v2014
    %2032 = vmatpush.bf16.msra.mxu0 %v2013
    %2033 = vmatpush.bf16.msra.mxu0 %v2012
    %2034 = vmatpush.bf16.msra.mxu0 %v2011
    %2035 = vmatmul.bf16.gmra.mxu0 %v1965
    %v2036 = vpop.f32.mrf.mxu0
    %v2037 = vadd.f32 0.0, %v2036
    %v2038 = vpop.f32.mrf.mxu0
    %v2039 = vadd.f32 0.0, %v2038
    %2040 = vmatmul.bf16.gmra.mxu0 %v1967
    %v2041 = vpop.f32.mrf.mxu0
    %v2042 = vadd.f32 0.0, %v2041
    %v2043 = vpop.f32.mrf.mxu0
    %v2044 = vadd.f32 0.0, %v2043
    %2045 = vmatmul.bf16.gmra.mxu0 %v1969
    %v2046 = vpop.f32.mrf.mxu0
    %v2047 = vadd.f32 0.0, %v2046
    %v2048 = vpop.f32.mrf.mxu0
    %v2049 = vadd.f32 0.0, %v2048
    %2050 = vmatmul.bf16.gmra.mxu0 %v1971
    %v2051 = vpop.f32.mrf.mxu0
    %v2052 = vadd.f32 0.0, %v2051
    %v2053 = vpop.f32.mrf.mxu0
    %v2054 = vadd.f32 0.0, %v2053
    %2055 = vmatmul.bf16.gmra.mxu0 %v1973
    %v2056 = vpop.f32.mrf.mxu0
    %v2057 = vadd.f32 0.0, %v2056
    %v2058 = vpop.f32.mrf.mxu0
    %v2059 = vadd.f32 0.0, %v2058
    %2060 = vdwg.mxu0
    %v2061 = vadd.f32 %v1918, %v2037
    %v2062 = vadd.f32 %v1920, %v2039
    %v2063 = vadd.f32 %v1923, %v2042
    %v2064 = vadd.f32 %v1925, %v2044
    %v2065 = vadd.f32 %v1928, %v2047
    %v2066 = vadd.f32 %v1930, %v2049
    %v2067 = vadd.f32 %v1933, %v2052
    %v2068 = vadd.f32 %v1935, %v2054
    %v2069 = vadd.f32 %v1938, %v2057
    %v2070 = vadd.f32 %v1940, %v2059
    %v2071 = vld [vmem:[#allocation3 + $0x4] sm:$0xe]
    %v2072 = vld [vmem:[#allocation3 + $0x8] sm:$0xf]
    %v2073 = vld [vmem:[#allocation3 + $0xc] sm:$0xf]
    %v2074 = vld [vmem:[#allocation3 + $0x10] sm:$0xf]
    %v2075 = vld [vmem:[#allocation3 + $0x14] sm:$0xf]
    %v2076 = vld [vmem:[#allocation3 + $0x18] sm:$0xf]
    %v2077 = vld [vmem:[#allocation3 + $0x1c] sm:$0xf]
    %v2078 = vld [vmem:[#allocation3 + $0x20] sm:$0xf]
    %v2079 = vld [vmem:[#allocation3 + $0x24] sm:$0xf]
    %v2080 = vld [vmem:[#allocation3 + $0x28] sm:$0xf]
    %v2081 = vld [vmem:[#allocation3 + $0x2c] sm:$0x1]
    %s2082 = scalar_lea.vmem [#allocation6], 192
    %v2083 = vld [vmem:[%s2082] sm:$0xf]
    %v2084 = vld [vmem:[%s2082 + $0x4] sm:$0xf]
    %v2085 = vld [vmem:[%s2082 + $0x8] sm:$0xf]
    %v2086 = vld [vmem:[%s2082 + $0xc] sm:$0xf]
    %v2087 = vld [vmem:[%s2082 + $0x10] sm:$0xf]
    %v2088 = vld [vmem:[%s2082 + $0x14] sm:$0xf]
    %v2089 = vld [vmem:[%s2082 + $0x18] sm:$0xf]
    %v2090 = vld [vmem:[%s2082 + $0x1c] sm:$0xf]
    %v2091 = vld [vmem:[%s2082 + $0x20] sm:$0xf]
    %v2092 = vld [vmem:[%s2082 + $0x24] sm:$0xf]
    %v2093 = vld [vmem:[%s2082 + $0x28] sm:$0xf]
    %v2094 = vld [vmem:[%s2082 + $0x2c] sm:$0xf]
    %v2095 = vld [vmem:[%s2082 + $0x30] sm:$0xf]
    %v2096 = vld [vmem:[%s2082 + $0x34] sm:$0xf]
    %v2097 = vld [vmem:[%s2082 + $0x38] sm:$0xf]
    %v2098 = vld [vmem:[%s2082 + $0x3c] sm:$0xf]
    %v2110 = vunpack.c.l.b16 %v2071
    %v2111 = vunpack.c.l.b16 %v2072
    %v2112 = vunpack.c.l.b16 %v2073
    %v2113 = vunpack.c.l.b16 %v2074
    %v2114 = vunpack.c.l.b16 %v2075
    %v2115 = vunpack.c.l.b16 %v2076
    %v2116 = vunpack.c.l.b16 %v2077
    %v2117 = vunpack.c.l.b16 %v2078
    %v2118 = vunpack.c.l.b16 %v2079
    %v2119 = vunpack.c.l.b16 %v2080
    %v2120 = vunpack.c.l.b16 %v2081
    %v2121 = vpack.c.b16 %v2111, %v2110
    %v2122 = vpack.c.b16 %v2113, %v2112
    %v2123 = vpack.c.b16 %v2115, %v2114
    %v2124 = vpack.c.b16 %v2117, %v2116
    %v2125 = vpack.c.b16 %v2119, %v2118
    %v2126 = vpack.c.b16 %v2120, %v2120
    %v2127 = vrot.slane %v2121, 1
    %v2128 = vrot.slane %v2122, 1
    %v2129 = vsel %vm629, %v2127, %v2128
    %v2130 = vrot.slane %v2123, 1
    %v2131 = vsel %vm629, %v2128, %v2130
    %v2132 = vrot.slane %v2124, 1
    %v2133 = vsel %vm629, %v2130, %v2132
    %v2134 = vrot.slane %v2125, 1
    %v2135 = vsel %vm629, %v2132, %v2134
    %v2136 = vrot.slane %v2126, 1
    %v2137 = vsel %vm629, %v2134, %v2136
    %v2159 = vunpack.c.l.b16 %v2083
    %v2160 = vunpack.c.l.b16 %v2084
    %v2161 = vunpack.c.l.b16 %v2085
    %v2162 = vunpack.c.l.b16 %v2086
    %v2163 = vunpack.c.l.b16 %v2087
    %v2164 = vunpack.c.l.b16 %v2088
    %v2165 = vunpack.c.l.b16 %v2089
    %v2166 = vunpack.c.l.b16 %v2090
    %v2167 = vunpack.c.l.b16 %v2091
    %v2168 = vunpack.c.l.b16 %v2092
    %v2169 = vunpack.c.l.b16 %v2093
    %v2170 = vunpack.c.l.b16 %v2094
    %v2171 = vunpack.c.l.b16 %v2095
    %v2172 = vunpack.c.l.b16 %v2096
    %v2173 = vunpack.c.l.b16 %v2097
    %v2174 = vunpack.c.l.b16 %v2098
    %v2175 = vpack.c.b16 %v2160, %v2159
    %v2176 = vpack.c.b16 %v2162, %v2161
    %v2177 = vpack.c.b16 %v2164, %v2163
    %v2178 = vpack.c.b16 %v2166, %v2165
    %v2179 = vpack.c.b16 %v2168, %v2167
    %v2180 = vpack.c.b16 %v2170, %v2169
    %v2181 = vpack.c.b16 %v2172, %v2171
    %v2182 = vpack.c.b16 %v2174, %v2173
    %2191 = vmatpush.bf16.msra.mxu0 %v2182
    %2192 = vmatpush.bf16.msra.mxu0 %v2181
    %2193 = vmatpush.bf16.msra.mxu0 %v2180
    %2194 = vmatpush.bf16.msra.mxu0 %v2179
    %2195 = vmatpush.bf16.msra.mxu0 %v2178
    %2196 = vmatpush.bf16.msra.mxu0 %v2177
    %2197 = vmatpush.bf16.msra.mxu0 %v2176
    %2198 = vmatpush.bf16.msra.mxu0 %v2175
    %2199 = vmatmul.bf16.gmra.mxu0 %v2129
    %v2200 = vpop.f32.mrf.mxu0
    %v2201 = vadd.f32 0.0, %v2200
    %v2202 = vpop.f32.mrf.mxu0
    %v2203 = vadd.f32 0.0, %v2202
    %2204 = vmatmul.bf16.gmra.mxu0 %v2131
    %v2205 = vpop.f32.mrf.mxu0
    %v2206 = vadd.f32 0.0, %v2205
    %v2207 = vpop.f32.mrf.mxu0
    %v2208 = vadd.f32 0.0, %v2207
    %2209 = vmatmul.bf16.gmra.mxu0 %v2133
    %v2210 = vpop.f32.mrf.mxu0
    %v2211 = vadd.f32 0.0, %v2210
    %v2212 = vpop.f32.mrf.mxu0
    %v2213 = vadd.f32 0.0, %v2212
    %2214 = vmatmul.bf16.gmra.mxu0 %v2135
    %v2215 = vpop.f32.mrf.mxu0
    %v2216 = vadd.f32 0.0, %v2215
    %v2217 = vpop.f32.mrf.mxu0
    %v2218 = vadd.f32 0.0, %v2217
    %2219 = vmatmul.bf16.gmra.mxu0 %v2137
    %v2220 = vpop.f32.mrf.mxu0
    %v2221 = vadd.f32 0.0, %v2220
    %v2222 = vpop.f32.mrf.mxu0
    %v2223 = vadd.f32 0.0, %v2222
    %2224 = vdwg.mxu0
    %v2225 = vadd.f32 %v2061, %v2201
    %v2226 = vadd.f32 %v2062, %v2203
    %v2227 = vadd.f32 %v2063, %v2206
    %v2228 = vadd.f32 %v2064, %v2208
    %v2229 = vadd.f32 %v2065, %v2211
    %v2230 = vadd.f32 %v2066, %v2213
    %v2231 = vadd.f32 %v2067, %v2216
    %v2232 = vadd.f32 %v2068, %v2218
    %v2233 = vadd.f32 %v2069, %v2221
    %v2234 = vadd.f32 %v2070, %v2223
    %v2235 = vld [vmem:[#allocation3 + $0x2c] sm:$0x3]
    %s2236 = scalar_lea.vmem [#allocation6], 256
    %v2237 = vld [vmem:[%s2236] sm:$0xf]
    %v2238 = vld [vmem:[%s2236 + $0x4] sm:$0xf]
    %v2239 = vld [vmem:[%s2236 + $0x8] sm:$0xf]
    %v2240 = vld [vmem:[%s2236 + $0xc] sm:$0xf]
    %v2241 = vld [vmem:[%s2236 + $0x10] sm:$0xf]
    %v2242 = vld [vmem:[%s2236 + $0x14] sm:$0xf]
    %v2243 = vld [vmem:[%s2236 + $0x18] sm:$0xf]
    %v2244 = vld [vmem:[%s2236 + $0x1c] sm:$0xf]
    %v2245 = vld [vmem:[%s2236 + $0x20] sm:$0xf]
    %v2246 = vld [vmem:[%s2236 + $0x24] sm:$0xf]
    %v2247 = vld [vmem:[%s2236 + $0x28] sm:$0xf]
    %v2248 = vld [vmem:[%s2236 + $0x2c] sm:$0xf]
    %v2249 = vld [vmem:[%s2236 + $0x30] sm:$0xf]
    %v2250 = vld [vmem:[%s2236 + $0x34] sm:$0xf]
    %v2251 = vld [vmem:[%s2236 + $0x38] sm:$0xf]
    %v2252 = vld [vmem:[%s2236 + $0x3c] sm:$0xf]
    %v2254 = vunpack.c.l.b16 %v2235
    %v2255 = vpack.c.b16 %v2254, %v2254
    %v2257 = vshrl.u32 %v2121, 16
    %v2259 = vrot.slane %v2257, 1
    %v2260 = vshll.u32 %v2121, 16
    %v2262 = vrot.slane %v2260, 2
    %v2263 = vor.u32 %v2259, %v2262
    %v2265 = vshrl.u32 %v2122, 16
    %v2267 = vrot.slane %v2265, 1
    %v2268 = vshll.u32 %v2122, 16
    %v2270 = vrot.slane %v2268, 2
    %v2271 = vor.u32 %v2267, %v2270
    %v2272 = vsel %vm896, %v2263, %v2271
    %v2274 = vshrl.u32 %v2123, 16
    %v2276 = vrot.slane %v2274, 1
    %v2277 = vshll.u32 %v2123, 16
    %v2279 = vrot.slane %v2277, 2
    %v2280 = vor.u32 %v2276, %v2279
    %v2281 = vsel %vm896, %v2271, %v2280
    %v2283 = vshrl.u32 %v2124, 16
    %v2285 = vrot.slane %v2283, 1
    %v2286 = vshll.u32 %v2124, 16
    %v2288 = vrot.slane %v2286, 2
    %v2289 = vor.u32 %v2285, %v2288
    %v2290 = vsel %vm896, %v2280, %v2289
    %v2292 = vshrl.u32 %v2125, 16
    %v2294 = vrot.slane %v2292, 1
    %v2295 = vshll.u32 %v2125, 16
    %v2297 = vrot.slane %v2295, 2
    %v2298 = vor.u32 %v2294, %v2297
    %v2299 = vsel %vm896, %v2289, %v2298
    %v2301 = vshrl.u32 %v2255, 16
    %v2303 = vrot.slane %v2301, 1
    %v2304 = vshll.u32 %v2255, 16
    %v2306 = vrot.slane %v2304, 2
    %v2307 = vor.u32 %v2303, %v2306
    %v2308 = vsel %vm896, %v2298, %v2307
    %v2330 = vunpack.c.l.b16 %v2237
    %v2331 = vunpack.c.l.b16 %v2238
    %v2332 = vunpack.c.l.b16 %v2239
    %v2333 = vunpack.c.l.b16 %v2240
    %v2334 = vunpack.c.l.b16 %v2241
    %v2335 = vunpack.c.l.b16 %v2242
    %v2336 = vunpack.c.l.b16 %v2243
    %v2337 = vunpack.c.l.b16 %v2244
    %v2338 = vunpack.c.l.b16 %v2245
    %v2339 = vunpack.c.l.b16 %v2246
    %v2340 = vunpack.c.l.b16 %v2247
    %v2341 = vunpack.c.l.b16 %v2248
    %v2342 = vunpack.c.l.b16 %v2249
    %v2343 = vunpack.c.l.b16 %v2250
    %v2344 = vunpack.c.l.b16 %v2251
    %v2345 = vunpack.c.l.b16 %v2252
    %v2346 = vpack.c.b16 %v2331, %v2330
    %v2347 = vpack.c.b16 %v2333, %v2332
    %v2348 = vpack.c.b16 %v2335, %v2334
    %v2349 = vpack.c.b16 %v2337, %v2336
    %v2350 = vpack.c.b16 %v2339, %v2338
    %v2351 = vpack.c.b16 %v2341, %v2340
    %v2352 = vpack.c.b16 %v2343, %v2342
    %v2353 = vpack.c.b16 %v2345, %v2344
    %2362 = vmatpush.bf16.msra.mxu0 %v2353
    %2363 = vmatpush.bf16.msra.mxu0 %v2352
    %2364 = vmatpush.bf16.msra.mxu0 %v2351
    %2365 = vmatpush.bf16.msra.mxu0 %v2350
    %2366 = vmatpush.bf16.msra.mxu0 %v2349
    %2367 = vmatpush.bf16.msra.mxu0 %v2348
    %2368 = vmatpush.bf16.msra.mxu0 %v2347
    %2369 = vmatpush.bf16.msra.mxu0 %v2346
    %2370 = vmatmul.bf16.gmra.mxu0 %v2272
    %v2371 = vpop.f32.mrf.mxu0
    %v2372 = vadd.f32 0.0, %v2371
    %v2373 = vpop.f32.mrf.mxu0
    %v2374 = vadd.f32 0.0, %v2373
    %2375 = vmatmul.bf16.gmra.mxu0 %v2281
    %v2376 = vpop.f32.mrf.mxu0
    %v2377 = vadd.f32 0.0, %v2376
    %v2378 = vpop.f32.mrf.mxu0
    %v2379 = vadd.f32 0.0, %v2378
    %2380 = vmatmul.bf16.gmra.mxu0 %v2290
    %v2381 = vpop.f32.mrf.mxu0
    %v2382 = vadd.f32 0.0, %v2381
    %v2383 = vpop.f32.mrf.mxu0
    %v2384 = vadd.f32 0.0, %v2383
    %2385 = vmatmul.bf16.gmra.mxu0 %v2299
    %v2386 = vpop.f32.mrf.mxu0
    %v2387 = vadd.f32 0.0, %v2386
    %v2388 = vpop.f32.mrf.mxu0
    %v2389 = vadd.f32 0.0, %v2388
    %2390 = vmatmul.bf16.gmra.mxu0 %v2308
    %v2391 = vpop.f32.mrf.mxu0
    %v2392 = vadd.f32 0.0, %v2391
    %v2393 = vpop.f32.mrf.mxu0
    %v2394 = vadd.f32 0.0, %v2393
    %2395 = vdwg.mxu0
    %v2396 = vadd.f32 %v2225, %v2372
    %v2397 = vadd.f32 %v2226, %v2374
    %v2398 = vadd.f32 %v2227, %v2377
    %v2399 = vadd.f32 %v2228, %v2379
    %v2400 = vadd.f32 %v2229, %v2382
    %v2401 = vadd.f32 %v2230, %v2384
    %v2402 = vadd.f32 %v2231, %v2387
    %v2403 = vadd.f32 %v2232, %v2389
    %v2404 = vadd.f32 %v2233, %v2392
    %v2405 = vadd.f32 %v2234, %v2394
    %v2406 = vld [vmem:[#allocation3 + $0x4] sm:$0xc]
    %s2407 = scalar_lea.vmem [#allocation6], 320
    %v2408 = vld [vmem:[%s2407] sm:$0xf]
    %v2409 = vld [vmem:[%s2407 + $0x4] sm:$0xf]
    %v2410 = vld [vmem:[%s2407 + $0x8] sm:$0xf]
    %v2411 = vld [vmem:[%s2407 + $0xc] sm:$0xf]
    %v2412 = vld [vmem:[%s2407 + $0x10] sm:$0xf]
    %v2413 = vld [vmem:[%s2407 + $0x14] sm:$0xf]
    %v2414 = vld [vmem:[%s2407 + $0x18] sm:$0xf]
    %v2415 = vld [vmem:[%s2407 + $0x1c] sm:$0xf]
    %v2416 = vld [vmem:[%s2407 + $0x20] sm:$0xf]
    %v2417 = vld [vmem:[%s2407 + $0x24] sm:$0xf]
    %v2418 = vld [vmem:[%s2407 + $0x28] sm:$0xf]
    %v2419 = vld [vmem:[%s2407 + $0x2c] sm:$0xf]
    %v2420 = vld [vmem:[%s2407 + $0x30] sm:$0xf]
    %v2421 = vld [vmem:[%s2407 + $0x34] sm:$0xf]
    %v2422 = vld [vmem:[%s2407 + $0x38] sm:$0xf]
    %v2423 = vld [vmem:[%s2407 + $0x3c] sm:$0xf]
    %v2425 = vunpack.c.l.b16 %v2406
    %v2426 = vpack.c.b16 %v2111, %v2425
    %v2427 = vrot.slane %v2426, 2
    %v2428 = vrot.slane %v2122, 2
    %v2429 = vsel %vm1051, %v2427, %v2428
    %v2430 = vrot.slane %v2123, 2
    %v2431 = vsel %vm1051, %v2428, %v2430
    %v2432 = vrot.slane %v2124, 2
    %v2433 = vsel %vm1051, %v2430, %v2432
    %v2434 = vrot.slane %v2125, 2
    %v2435 = vsel %vm1051, %v2432, %v2434
    %v2436 = vrot.slane %v2255, 2
    %v2437 = vsel %vm1051, %v2434, %v2436
    %v2459 = vunpack.c.l.b16 %v2408
    %v2460 = vunpack.c.l.b16 %v2409
    %v2461 = vunpack.c.l.b16 %v2410
    %v2462 = vunpack.c.l.b16 %v2411
    %v2463 = vunpack.c.l.b16 %v2412
    %v2464 = vunpack.c.l.b16 %v2413
    %v2465 = vunpack.c.l.b16 %v2414
    %v2466 = vunpack.c.l.b16 %v2415
    %v2467 = vunpack.c.l.b16 %v2416
    %v2468 = vunpack.c.l.b16 %v2417
    %v2469 = vunpack.c.l.b16 %v2418
    %v2470 = vunpack.c.l.b16 %v2419
    %v2471 = vunpack.c.l.b16 %v2420
    %v2472 = vunpack.c.l.b16 %v2421
    %v2473 = vunpack.c.l.b16 %v2422
    %v2474 = vunpack.c.l.b16 %v2423
    %v2475 = vpack.c.b16 %v2460, %v2459
    %v2476 = vpack.c.b16 %v2462, %v2461
    %v2477 = vpack.c.b16 %v2464, %v2463
    %v2478 = vpack.c.b16 %v2466, %v2465
    %v2479 = vpack.c.b16 %v2468, %v2467
    %v2480 = vpack.c.b16 %v2470, %v2469
    %v2481 = vpack.c.b16 %v2472, %v2471
    %v2482 = vpack.c.b16 %v2474, %v2473
    %2491 = vmatpush.bf16.msra.mxu0 %v2482
    %2492 = vmatpush.bf16.msra.mxu0 %v2481
    %2493 = vmatpush.bf16.msra.mxu0 %v2480
    %2494 = vmatpush.bf16.msra.mxu0 %v2479
    %2495 = vmatpush.bf16.msra.mxu0 %v2478
    %2496 = vmatpush.bf16.msra.mxu0 %v2477
    %2497 = vmatpush.bf16.msra.mxu0 %v2476
    %2498 = vmatpush.bf16.msra.mxu0 %v2475
    %2499 = vmatmul.bf16.gmra.mxu0 %v2429
    %v2500 = vpop.f32.mrf.mxu0
    %v2501 = vadd.f32 0.0, %v2500
    %v2502 = vpop.f32.mrf.mxu0
    %v2503 = vadd.f32 0.0, %v2502
    %2504 = vmatmul.bf16.gmra.mxu0 %v2431
    %v2505 = vpop.f32.mrf.mxu0
    %v2506 = vadd.f32 0.0, %v2505
    %v2507 = vpop.f32.mrf.mxu0
    %v2508 = vadd.f32 0.0, %v2507
    %2509 = vmatmul.bf16.gmra.mxu0 %v2433
    %v2510 = vpop.f32.mrf.mxu0
    %v2511 = vadd.f32 0.0, %v2510
    %v2512 = vpop.f32.mrf.mxu0
    %v2513 = vadd.f32 0.0, %v2512
    %2514 = vmatmul.bf16.gmra.mxu0 %v2435
    %v2515 = vpop.f32.mrf.mxu0
    %v2516 = vadd.f32 0.0, %v2515
    %v2517 = vpop.f32.mrf.mxu0
    %v2518 = vadd.f32 0.0, %v2517
    %2519 = vmatmul.bf16.gmra.mxu0 %v2437
    %v2520 = vpop.f32.mrf.mxu0
    %v2521 = vadd.f32 0.0, %v2520
    %v2522 = vpop.f32.mrf.mxu0
    %v2523 = vadd.f32 0.0, %v2522
    %2524 = vdwg.mxu0
    %v2525 = vadd.f32 %v2396, %v2501
    %v2526 = vadd.f32 %v2397, %v2503
    %v2527 = vadd.f32 %v2398, %v2506
    %v2528 = vadd.f32 %v2399, %v2508
    %v2529 = vadd.f32 %v2400, %v2511
    %v2530 = vadd.f32 %v2401, %v2513
    %v2531 = vadd.f32 %v2402, %v2516
    %v2532 = vadd.f32 %v2403, %v2518
    %v2533 = vadd.f32 %v2404, %v2521
    %v2534 = vadd.f32 %v2405, %v2523
    %v2535 = vld [vmem:[#allocation3 + $0x8] sm:$0xc]
    %v2536 = vld [vmem:[#allocation3 + $0xc] sm:$0xf]
    %v2537 = vld [vmem:[#allocation3 + $0x10] sm:$0xf]
    %v2538 = vld [vmem:[#allocation3 + $0x14] sm:$0xf]
    %v2539 = vld [vmem:[#allocation3 + $0x18] sm:$0xf]
    %v2540 = vld [vmem:[#allocation3 + $0x1c] sm:$0xf]
    %v2541 = vld [vmem:[#allocation3 + $0x20] sm:$0xf]
    %v2542 = vld [vmem:[#allocation3 + $0x24] sm:$0xf]
    %v2543 = vld [vmem:[#allocation3 + $0x28] sm:$0xf]
    %v2544 = vld [vmem:[#allocation3 + $0x2c] sm:$0xf]
    %v2545 = vld [vmem:[#allocation3 + $0x30] sm:$0x3]
    %s2546 = scalar_lea.vmem [#allocation6], 384
    %v2547 = vld [vmem:[%s2546] sm:$0xf]
    %v2548 = vld [vmem:[%s2546 + $0x4] sm:$0xf]
    %v2549 = vld [vmem:[%s2546 + $0x8] sm:$0xf]
    %v2550 = vld [vmem:[%s2546 + $0xc] sm:$0xf]
    %v2551 = vld [vmem:[%s2546 + $0x10] sm:$0xf]
    %v2552 = vld [vmem:[%s2546 + $0x14] sm:$0xf]
    %v2553 = vld [vmem:[%s2546 + $0x18] sm:$0xf]
    %v2554 = vld [vmem:[%s2546 + $0x1c] sm:$0xf]
    %v2555 = vld [vmem:[%s2546 + $0x20] sm:$0xf]
    %v2556 = vld [vmem:[%s2546 + $0x24] sm:$0xf]
    %v2557 = vld [vmem:[%s2546 + $0x28] sm:$0xf]
    %v2558 = vld [vmem:[%s2546 + $0x2c] sm:$0xf]
    %v2559 = vld [vmem:[%s2546 + $0x30] sm:$0xf]
    %v2560 = vld [vmem:[%s2546 + $0x34] sm:$0xf]
    %v2561 = vld [vmem:[%s2546 + $0x38] sm:$0xf]
    %v2562 = vld [vmem:[%s2546 + $0x3c] sm:$0xf]
    %v2574 = vunpack.c.l.b16 %v2535
    %v2575 = vunpack.c.l.b16 %v2536
    %v2576 = vunpack.c.l.b16 %v2537
    %v2577 = vunpack.c.l.b16 %v2538
    %v2578 = vunpack.c.l.b16 %v2539
    %v2579 = vunpack.c.l.b16 %v2540
    %v2580 = vunpack.c.l.b16 %v2541
    %v2581 = vunpack.c.l.b16 %v2542
    %v2582 = vunpack.c.l.b16 %v2543
    %v2583 = vunpack.c.l.b16 %v2544
    %v2584 = vunpack.c.l.b16 %v2545
    %v2585 = vpack.c.b16 %v2575, %v2574
    %v2586 = vpack.c.b16 %v2577, %v2576
    %v2587 = vpack.c.b16 %v2579, %v2578
    %v2588 = vpack.c.b16 %v2581, %v2580
    %v2589 = vpack.c.b16 %v2583, %v2582
    %v2590 = vpack.c.b16 %v2584, %v2584
    %v2591 = vrot.slane %v2585, 2
    %v2592 = vrot.slane %v2586, 2
    %v2593 = vsel %vm1051, %v2591, %v2592
    %v2594 = vrot.slane %v2587, 2
    %v2595 = vsel %vm1051, %v2592, %v2594
    %v2596 = vrot.slane %v2588, 2
    %v2597 = vsel %vm1051, %v2594, %v2596
    %v2598 = vrot.slane %v2589, 2
    %v2599 = vsel %vm1051, %v2596, %v2598
    %v2600 = vrot.slane %v2590, 2
    %v2601 = vsel %vm1051, %v2598, %v2600
    %v2623 = vunpack.c.l.b16 %v2547
    %v2624 = vunpack.c.l.b16 %v2548
    %v2625 = vunpack.c.l.b16 %v2549
    %v2626 = vunpack.c.l.b16 %v2550
    %v2627 = vunpack.c.l.b16 %v2551
    %v2628 = vunpack.c.l.b16 %v2552
    %v2629 = vunpack.c.l.b16 %v2553
    %v2630 = vunpack.c.l.b16 %v2554
    %v2631 = vunpack.c.l.b16 %v2555
    %v2632 = vunpack.c.l.b16 %v2556
    %v2633 = vunpack.c.l.b16 %v2557
    %v2634 = vunpack.c.l.b16 %v2558
    %v2635 = vunpack.c.l.b16 %v2559
    %v2636 = vunpack.c.l.b16 %v2560
    %v2637 = vunpack.c.l.b16 %v2561
    %v2638 = vunpack.c.l.b16 %v2562
    %v2639 = vpack.c.b16 %v2624, %v2623
    %v2640 = vpack.c.b16 %v2626, %v2625
    %v2641 = vpack.c.b16 %v2628, %v2627
    %v2642 = vpack.c.b16 %v2630, %v2629
    %v2643 = vpack.c.b16 %v2632, %v2631
    %v2644 = vpack.c.b16 %v2634, %v2633
    %v2645 = vpack.c.b16 %v2636, %v2635
    %v2646 = vpack.c.b16 %v2638, %v2637
    %2655 = vmatpush.bf16.msra.mxu0 %v2646
    %2656 = vmatpush.bf16.msra.mxu0 %v2645
    %2657 = vmatpush.bf16.msra.mxu0 %v2644
    %2658 = vmatpush.bf16.msra.mxu0 %v2643
    %2659 = vmatpush.bf16.msra.mxu0 %v2642
    %2660 = vmatpush.bf16.msra.mxu0 %v2641
    %2661 = vmatpush.bf16.msra.mxu0 %v2640
    %2662 = vmatpush.bf16.msra.mxu0 %v2639
    %2663 = vmatmul.bf16.gmra.mxu0 %v2593
    %v2664 = vpop.f32.mrf.mxu0
    %v2665 = vadd.f32 0.0, %v2664
    %v2666 = vpop.f32.mrf.mxu0
    %v2667 = vadd.f32 0.0, %v2666
    %2668 = vmatmul.bf16.gmra.mxu0 %v2595
    %v2669 = vpop.f32.mrf.mxu0
    %v2670 = vadd.f32 0.0, %v2669
    %v2671 = vpop.f32.mrf.mxu0
    %v2672 = vadd.f32 0.0, %v2671
    %2673 = vmatmul.bf16.gmra.mxu0 %v2597
    %v2674 = vpop.f32.mrf.mxu0
    %v2675 = vadd.f32 0.0, %v2674
    %v2676 = vpop.f32.mrf.mxu0
    %v2677 = vadd.f32 0.0, %v2676
    %2678 = vmatmul.bf16.gmra.mxu0 %v2599
    %v2679 = vpop.f32.mrf.mxu0
    %v2680 = vadd.f32 0.0, %v2679
    %v2681 = vpop.f32.mrf.mxu0
    %v2682 = vadd.f32 0.0, %v2681
    %2683 = vmatmul.bf16.gmra.mxu0 %v2601
    %v2684 = vpop.f32.mrf.mxu0
    %v2685 = vadd.f32 0.0, %v2684
    %v2686 = vpop.f32.mrf.mxu0
    %v2687 = vadd.f32 0.0, %v2686
    %2688 = vdwg.mxu0
    %v2689 = vadd.f32 %v2525, %v2665
    %v2690 = vadd.f32 %v2526, %v2667
    %v2691 = vadd.f32 %v2527, %v2670
    %v2692 = vadd.f32 %v2528, %v2672
    %v2693 = vadd.f32 %v2529, %v2675
    %v2694 = vadd.f32 %v2530, %v2677
    %v2695 = vadd.f32 %v2531, %v2680
    %v2696 = vadd.f32 %v2532, %v2682
    %v2697 = vadd.f32 %v2533, %v2685
    %v2698 = vadd.f32 %v2534, %v2687
    %v2699 = vld [vmem:[#allocation3 + $0x30] sm:$0x7]
    %s2700 = scalar_lea.vmem [#allocation6], 448
    %v2701 = vld [vmem:[%s2700] sm:$0xf]
    %v2702 = vld [vmem:[%s2700 + $0x4] sm:$0xf]
    %v2703 = vld [vmem:[%s2700 + $0x8] sm:$0xf]
    %v2704 = vld [vmem:[%s2700 + $0xc] sm:$0xf]
    %v2705 = vld [vmem:[%s2700 + $0x10] sm:$0xf]
    %v2706 = vld [vmem:[%s2700 + $0x14] sm:$0xf]
    %v2707 = vld [vmem:[%s2700 + $0x18] sm:$0xf]
    %v2708 = vld [vmem:[%s2700 + $0x1c] sm:$0xf]
    %v2709 = vld [vmem:[%s2700 + $0x20] sm:$0xf]
    %v2710 = vld [vmem:[%s2700 + $0x24] sm:$0xf]
    %v2711 = vld [vmem:[%s2700 + $0x28] sm:$0xf]
    %v2712 = vld [vmem:[%s2700 + $0x2c] sm:$0xf]
    %v2713 = vld [vmem:[%s2700 + $0x30] sm:$0xf]
    %v2714 = vld [vmem:[%s2700 + $0x34] sm:$0xf]
    %v2715 = vld [vmem:[%s2700 + $0x38] sm:$0xf]
    %v2716 = vld [vmem:[%s2700 + $0x3c] sm:$0xf]
    %v2718 = vunpack.c.l.b16 %v2699
    %v2719 = vpack.c.b16 %v2718, %v2718
    %v2721 = vshrl.u32 %v2585, 16
    %v2723 = vrot.slane %v2721, 2
    %v2724 = vshll.u32 %v2585, 16
    %v2726 = vrot.slane %v2724, 3
    %v2727 = vor.u32 %v2723, %v2726
    %v2729 = vshrl.u32 %v2586, 16
    %v2731 = vrot.slane %v2729, 2
    %v2732 = vshll.u32 %v2586, 16
    %v2734 = vrot.slane %v2732, 3
    %v2735 = vor.u32 %v2731, %v2734
    %v2736 = vsel %vm1318, %v2727, %v2735
    %v2738 = vshrl.u32 %v2587, 16
    %v2740 = vrot.slane %v2738, 2
    %v2741 = vshll.u32 %v2587, 16
    %v2743 = vrot.slane %v2741, 3
    %v2744 = vor.u32 %v2740, %v2743
    %v2745 = vsel %vm1318, %v2735, %v2744
    %v2747 = vshrl.u32 %v2588, 16
    %v2749 = vrot.slane %v2747, 2
    %v2750 = vshll.u32 %v2588, 16
    %v2752 = vrot.slane %v2750, 3
    %v2753 = vor.u32 %v2749, %v2752
    %v2754 = vsel %vm1318, %v2744, %v2753
    %v2756 = vshrl.u32 %v2589, 16
    %v2758 = vrot.slane %v2756, 2
    %v2759 = vshll.u32 %v2589, 16
    %v2761 = vrot.slane %v2759, 3
    %v2762 = vor.u32 %v2758, %v2761
    %v2763 = vsel %vm1318, %v2753, %v2762
    %v2765 = vshrl.u32 %v2719, 16
    %v2767 = vrot.slane %v2765, 2
    %v2768 = vshll.u32 %v2719, 16
    %v2770 = vrot.slane %v2768, 3
    %v2771 = vor.u32 %v2767, %v2770
    %v2772 = vsel %vm1318, %v2762, %v2771
    %v2794 = vunpack.c.l.b16 %v2701
    %v2795 = vunpack.c.l.b16 %v2702
    %v2796 = vunpack.c.l.b16 %v2703
    %v2797 = vunpack.c.l.b16 %v2704
    %v2798 = vunpack.c.l.b16 %v2705
    %v2799 = vunpack.c.l.b16 %v2706
    %v2800 = vunpack.c.l.b16 %v2707
    %v2801 = vunpack.c.l.b16 %v2708
    %v2802 = vunpack.c.l.b16 %v2709
    %v2803 = vunpack.c.l.b16 %v2710
    %v2804 = vunpack.c.l.b16 %v2711
    %v2805 = vunpack.c.l.b16 %v2712
    %v2806 = vunpack.c.l.b16 %v2713
    %v2807 = vunpack.c.l.b16 %v2714
    %v2808 = vunpack.c.l.b16 %v2715
    %v2809 = vunpack.c.l.b16 %v2716
    %v2810 = vpack.c.b16 %v2795, %v2794
    %v2811 = vpack.c.b16 %v2797, %v2796
    %v2812 = vpack.c.b16 %v2799, %v2798
    %v2813 = vpack.c.b16 %v2801, %v2800
    %v2814 = vpack.c.b16 %v2803, %v2802
    %v2815 = vpack.c.b16 %v2805, %v2804
    %v2816 = vpack.c.b16 %v2807, %v2806
    %v2817 = vpack.c.b16 %v2809, %v2808
    %2826 = vmatpush.bf16.msra.mxu0 %v2817
    %2827 = vmatpush.bf16.msra.mxu0 %v2816
    %2828 = vmatpush.bf16.msra.mxu0 %v2815
    %2829 = vmatpush.bf16.msra.mxu0 %v2814
    %2830 = vmatpush.bf16.msra.mxu0 %v2813
    %2831 = vmatpush.bf16.msra.mxu0 %v2812
    %2832 = vmatpush.bf16.msra.mxu0 %v2811
    %2833 = vmatpush.bf16.msra.mxu0 %v2810
    %2834 = vmatmul.bf16.gmra.mxu0 %v2736
    %v2835 = vpop.f32.mrf.mxu0
    %v2836 = vadd.f32 0.0, %v2835
    %v2837 = vpop.f32.mrf.mxu0
    %v2838 = vadd.f32 0.0, %v2837
    %2839 = vmatmul.bf16.gmra.mxu0 %v2745
    %v2840 = vpop.f32.mrf.mxu0
    %v2841 = vadd.f32 0.0, %v2840
    %v2842 = vpop.f32.mrf.mxu0
    %v2843 = vadd.f32 0.0, %v2842
    %2844 = vmatmul.bf16.gmra.mxu0 %v2754
    %v2845 = vpop.f32.mrf.mxu0
    %v2846 = vadd.f32 0.0, %v2845
    %v2847 = vpop.f32.mrf.mxu0
    %v2848 = vadd.f32 0.0, %v2847
    %2849 = vmatmul.bf16.gmra.mxu0 %v2763
    %v2850 = vpop.f32.mrf.mxu0
    %v2851 = vadd.f32 0.0, %v2850
    %v2852 = vpop.f32.mrf.mxu0
    %v2853 = vadd.f32 0.0, %v2852
    %2854 = vmatmul.bf16.gmra.mxu0 %v2772
    %v2855 = vpop.f32.mrf.mxu0
    %v2856 = vadd.f32 0.0, %v2855
    %v2857 = vpop.f32.mrf.mxu0
    %v2858 = vadd.f32 0.0, %v2857
    %2859 = vdwg.mxu0
    %v2860 = vadd.f32 %v2689, %v2836
    %v2861 = vadd.f32 %v2690, %v2838
    %v2862 = vadd.f32 %v2691, %v2841
    %v2863 = vadd.f32 %v2692, %v2843
    %v2864 = vadd.f32 %v2693, %v2846
    %v2865 = vadd.f32 %v2694, %v2848
    %v2866 = vadd.f32 %v2695, %v2851
    %v2867 = vadd.f32 %v2696, %v2853
    %v2868 = vadd.f32 %v2697, %v2856
    %v2869 = vadd.f32 %v2698, %v2858
    %v2870 = vld [vmem:[#allocation3 + $0x8] sm:$0x8]
    %s2871 = scalar_lea.vmem [#allocation6], 512
    %v2872 = vld [vmem:[%s2871] sm:$0xf]
    %v2873 = vld [vmem:[%s2871 + $0x4] sm:$0xf]
    %v2874 = vld [vmem:[%s2871 + $0x8] sm:$0xf]
    %v2875 = vld [vmem:[%s2871 + $0xc] sm:$0xf]
    %v2876 = vld [vmem:[%s2871 + $0x10] sm:$0xf]
    %v2877 = vld [vmem:[%s2871 + $0x14] sm:$0xf]
    %v2878 = vld [vmem:[%s2871 + $0x18] sm:$0xf]
    %v2879 = vld [vmem:[%s2871 + $0x1c] sm:$0xf]
    %v2880 = vld [vmem:[%s2871 + $0x20] sm:$0xf]
    %v2881 = vld [vmem:[%s2871 + $0x24] sm:$0xf]
    %v2882 = vld [vmem:[%s2871 + $0x28] sm:$0xf]
    %v2883 = vld [vmem:[%s2871 + $0x2c] sm:$0xf]
    %v2884 = vld [vmem:[%s2871 + $0x30] sm:$0xf]
    %v2885 = vld [vmem:[%s2871 + $0x34] sm:$0xf]
    %v2886 = vld [vmem:[%s2871 + $0x38] sm:$0xf]
    %v2887 = vld [vmem:[%s2871 + $0x3c] sm:$0xf]
    %v2889 = vunpack.c.l.b16 %v2870
    %v2890 = vpack.c.b16 %v2575, %v2889
    %v2891 = vrot.slane %v2890, 3
    %v2892 = vrot.slane %v2586, 3
    %v2893 = vsel %vm1473, %v2891, %v2892
    %v2894 = vrot.slane %v2587, 3
    %v2895 = vsel %vm1473, %v2892, %v2894
    %v2896 = vrot.slane %v2588, 3
    %v2897 = vsel %vm1473, %v2894, %v2896
    %v2898 = vrot.slane %v2589, 3
    %v2899 = vsel %vm1473, %v2896, %v2898
    %v2900 = vrot.slane %v2719, 3
    %v2901 = vsel %vm1473, %v2898, %v2900
    %v2923 = vunpack.c.l.b16 %v2872
    %v2924 = vunpack.c.l.b16 %v2873
    %v2925 = vunpack.c.l.b16 %v2874
    %v2926 = vunpack.c.l.b16 %v2875
    %v2927 = vunpack.c.l.b16 %v2876
    %v2928 = vunpack.c.l.b16 %v2877
    %v2929 = vunpack.c.l.b16 %v2878
    %v2930 = vunpack.c.l.b16 %v2879
    %v2931 = vunpack.c.l.b16 %v2880
    %v2932 = vunpack.c.l.b16 %v2881
    %v2933 = vunpack.c.l.b16 %v2882
    %v2934 = vunpack.c.l.b16 %v2883
    %v2935 = vunpack.c.l.b16 %v2884
    %v2936 = vunpack.c.l.b16 %v2885
    %v2937 = vunpack.c.l.b16 %v2886
    %v2938 = vunpack.c.l.b16 %v2887
    %v2939 = vpack.c.b16 %v2924, %v2923
    %v2940 = vpack.c.b16 %v2926, %v2925
    %v2941 = vpack.c.b16 %v2928, %v2927
    %v2942 = vpack.c.b16 %v2930, %v2929
    %v2943 = vpack.c.b16 %v2932, %v2931
    %v2944 = vpack.c.b16 %v2934, %v2933
    %v2945 = vpack.c.b16 %v2936, %v2935
    %v2946 = vpack.c.b16 %v2938, %v2937
    %2955 = vmatpush.bf16.msra.mxu0 %v2946
    %2956 = vmatpush.bf16.msra.mxu0 %v2945
    %2957 = vmatpush.bf16.msra.mxu0 %v2944
    %2958 = vmatpush.bf16.msra.mxu0 %v2943
    %2959 = vmatpush.bf16.msra.mxu0 %v2942
    %2960 = vmatpush.bf16.msra.mxu0 %v2941
    %2961 = vmatpush.bf16.msra.mxu0 %v2940
    %2962 = vmatpush.bf16.msra.mxu0 %v2939
    %2963 = vmatmul.bf16.gmra.mxu0 %v2893
    %v2964 = vpop.f32.mrf.mxu0
    %v2965 = vadd.f32 0.0, %v2964
    %v2966 = vpop.f32.mrf.mxu0
    %v2967 = vadd.f32 0.0, %v2966
    %2968 = vmatmul.bf16.gmra.mxu0 %v2895
    %v2969 = vpop.f32.mrf.mxu0
    %v2970 = vadd.f32 0.0, %v2969
    %v2971 = vpop.f32.mrf.mxu0
    %v2972 = vadd.f32 0.0, %v2971
    %2973 = vmatmul.bf16.gmra.mxu0 %v2897
    %v2974 = vpop.f32.mrf.mxu0
    %v2975 = vadd.f32 0.0, %v2974
    %v2976 = vpop.f32.mrf.mxu0
    %v2977 = vadd.f32 0.0, %v2976
    %2978 = vmatmul.bf16.gmra.mxu0 %v2899
    %v2979 = vpop.f32.mrf.mxu0
    %v2980 = vadd.f32 0.0, %v2979
    %v2981 = vpop.f32.mrf.mxu0
    %v2982 = vadd.f32 0.0, %v2981
    %2983 = vmatmul.bf16.gmra.mxu0 %v2901
    %v2984 = vpop.f32.mrf.mxu0
    %v2985 = vadd.f32 0.0, %v2984
    %v2986 = vpop.f32.mrf.mxu0
    %v2987 = vadd.f32 0.0, %v2986
    %2988 = vdwg.mxu0
    %v2989 = vadd.f32 %v2860, %v2965
    %v2990 = vadd.f32 %v2861, %v2967
    %v2991 = vadd.f32 %v2862, %v2970
    %v2992 = vadd.f32 %v2863, %v2972
    %v2993 = vadd.f32 %v2864, %v2975
    %v2994 = vadd.f32 %v2865, %v2977
    %v2995 = vadd.f32 %v2866, %v2980
    %v2996 = vadd.f32 %v2867, %v2982
    %v2997 = vadd.f32 %v2868, %v2985
    %v2998 = vadd.f32 %v2869, %v2987
    %v2999 = vld [vmem:[%s7] sm:$0x1]
    %v3001 = vperm.slane %v2999, 0
    %v3003 = vadd.f32 %v2989, %v3001
    %v3004 = vadd.f32 %v2990, %v3001
    %v3005 = vadd.f32 %v2991, %v3001
    %v3006 = vadd.f32 %v2992, %v3001
    %v3007 = vadd.f32 %v2993, %v3001
    %v3008 = vadd.f32 %v2994, %v3001
    %v3009 = vadd.f32 %v2995, %v3001
    %v3010 = vadd.f32 %v2996, %v3001
    %v3011 = vadd.f32 %v2997, %v3001
    %v3012 = vadd.f32 %v2998, %v3001
    %3013 = vst [vmem:[%s8] sm:$0xff] %v3003
    %3014 = vst [vmem:[%s8 + $0x8] sm:$0xff] %v3004
    %3015 = vst [vmem:[%s8 + $0x10] sm:$0xff] %v3005
    %3016 = vst [vmem:[%s8 + $0x18] sm:$0xff] %v3006
    %3017 = vst [vmem:[%s8 + $0x20] sm:$0xff] %v3007
    %3018 = vst [vmem:[%s8 + $0x28] sm:$0xff] %v3008
    %3019 = vst [vmem:[%s8 + $0x30] sm:$0xff] %v3009
    %3020 = vst [vmem:[%s8 + $0x38] sm:$0xff] %v3010
    %3021 = vst [vmem:[%s8 + $0x40] sm:$0xff] %v3011
    %3022 = vst [vmem:[%s8 + $0x48] sm:$0xff] %v3012
    // Predicated region
    $region42: #{model_forward.1} parent=1 // pred_check
      _
    $region43: #{model_forward.1} parent=1 // pred_check_branch
      %3024 = sbr.rel (0) target = $region45
    $region44: #{model_forward.1} parent=1 // pred_region
      _
    $region45: #{model_forward.1} parent=1 // pred_fallthru
      _
    // Predicated region
    $region46: #{model_forward.1} parent=1 // pred_check
      _
    $region47: #{model_forward.1} parent=1 // pred_check_branch
      %3026 = sbr.rel (0) target = $region49
    $region48: #{model_forward.1} parent=1 // pred_region
      _
    $region49: #{model_forward.1} parent=1 // pred_fallthru
      _
    %3027 = vsyncpa [#allocation5], 1
    %3028 = vsyncpa [#allocation7], 1

</llo_original>
